<compile_context>
chip_gen: v5e
topology: v5e:2x2
jax: 0.10.0
libtpu: 0.0.40
codegen_flags: <defaults>
</compile_context>

<pallas_src>
import jax
import jax.numpy as jnp
from jax import lax
from jax.experimental import pallas as pl
from jax.experimental.pallas import tpu as pltpu

# Small, module-consistent sizes
B = 2          # batch
E = 32         # encoded_size
P = 16         # projected_size
H = 32         # hidden_size
V = 24         # vocab_size = len(vocab)
T = 8          # max_words
START_ID = 1   # vocab('<start>')


def decoder_kernel(video_ref, wbig_ref, v2m_wih_ref, gi_bias_ref,
                   bhh_ref, wr_w_ref, wr_b_ref,
                   tokens_ref, logits_ref):
    f32 = jnp.float32

    # gi_const = (v2m(video) + w2m_bias) @ W_ih + b_ih   (folded; one MXU op)
    gi_const = jnp.dot(video_ref[...], v2m_wih_ref[...],
                       preferred_element_type=f32) + gi_bias_ref[...]

    wbig = wbig_ref[...]          # (H+V, 6H): [[0, W_hh], [embed@w2m@W_ih, 0]]
    bhh = bhh_ref[...]
    wr_w = wr_w_ref[...]
    wr_b = wr_b_ref[...]

    iota_v = lax.broadcasted_iota(jnp.int32, (B, V), 1)
    iota_t = lax.broadcasted_iota(jnp.int32, (B, T), 1)
    iota_f = lax.broadcasted_iota(jnp.int32, (B, H + V), 1)

    # State carried in vregs across the fully unrolled loop:
    #   xh  = [h (H lanes) | one-hot(prev word) (V lanes)]
    #   h   = gru hidden (duplicate of xh[:, :H] kept unsliced for gate math)
    #   tok = greedy token ids accumulated via select
    # TODO(synk): training-mode dropout / teacher forcing (random.random()) not modeled.
    xh = (iota_f == (H + START_ID)).astype(f32)   # h = 0, word = <start>
    h = jnp.zeros((B, H), f32)
    tok = jnp.zeros((B, T), jnp.int32)

    for i in range(T):                            # fully unrolled, static indices
        # One fused gate matmul: [h | onehot] @ [[0, W_hh], [E_w, 0]]
        g = jnp.dot(xh, wbig, preferred_element_type=f32)   # (B, 6H)
        gi = g[:, :3 * H] + gi_const                          # x-path gates
        gh = g[:, 3 * H:] + bhh                                # h-path gates

        # GRUCell (PyTorch gate order r, z, n)
        r = jax.nn.sigmoid(gi[:, :H] + gh[:, :H])
        z = jax.nn.sigmoid(gi[:, H:2 * H] + gh[:, H:2 * H])
        n = jnp.tanh(gi[:, 2 * H:] + r * gh[:, 2 * H:])
        h = (1.0 - z) * n + z * h

        # word_logits = word_restore(gru_h)
        logits = jnp.dot(h, wr_w, preferred_element_type=f32) + wr_b
        logits_ref[i] = logits                                 # static row store

        # greedy argmax (first max on ties, exact in f32)
        maxv = jnp.max(logits, axis=1, keepdims=True)
        wid = jnp.min(jnp.where(logits == maxv, iota_v, V),
                      axis=1, keepdims=True).astype(jnp.int32)  # (B, 1)
        tok = jnp.where(iota_t == i, wid, tok)

        # next-step input: [h_new | onehot(word_id)]
        xh = jnp.concatenate([h, (iota_v == wid).astype(f32)], axis=1)

    tokens_ref[...] = tok


def _vmem_spec():
    return pl.BlockSpec(memory_space=pltpu.MemorySpace.VMEM)


def decoder_sample(video, params):
    f32 = jnp.float32
    wih, whh = params["wih"], params["whh"]

    # Weight-only folding (done once per call; independent of the video input):
    #   embed_w  = embed @ w2m_w @ W_ih                      (V, 3H)
    #   w_big    = [[0, W_hh], [embed_w, 0]]                 (H+V, 6H)
    #   v2m_wih  = v2m_w @ W_ih                              (E, 3H)
    #   gi_bias  = (v2m_b + w2m_b) @ W_ih + b_ih             (1, 3H)
    embed_w = params["embed"] @ params["w2m_w"] @ wih
    w_big = jnp.block([[jnp.zeros((H, 3 * H), f32), whh],
                       [embed_w, jnp.zeros((V, 3 * H), f32)]])
    v2m_wih = params["v2m_w"] @ wih
    gi_bias = (params["v2m_b"] + params["w2m_b"]) @ wih + params["bih"]

    args = (video, w_big, v2m_wih, gi_bias,
            params["bhh"], params["wr_w"], params["wr_b"])

    tokens, logits = pl.pallas_call(
        decoder_kernel,
        out_shape=(jax.ShapeDtypeStruct((B, T), jnp.int32),
                   jax.ShapeDtypeStruct((T, B, V), jnp.float32)),
        in_specs=[_vmem_spec() for _ in args],
        out_specs=(_vmem_spec(), _vmem_spec()),
    )(*args)
    return tokens, jnp.transpose(logits, (1, 0, 2))   # (B, T), (B, T, V)


def decoder_sample_reference(video, params):
    """Pure-JAX reference mirroring the PyTorch forward (infer, no teacher forcing)."""
    vm = video @ params["v2m_w"] + params["v2m_b"]
    h = jnp.zeros((B, H), jnp.float32)
    word = jnp.broadcast_to(params["embed"][START_ID], (B, P))
    toks, lgs = [], []
    for _ in range(T):
        m = vm + word @ params["w2m_w"] + params["w2m_b"]
        gi = m @ params["wih"] + params["bih"]
        gh = h @ params["whh"] + params["bhh"]
        r = jax.nn.sigmoid(gi[:, :H] + gh[:, :H])
        z = jax.nn.sigmoid(gi[:, H:2 * H] + gh[:, H:2 * H])
        n = jnp.tanh(gi[:, 2 * H:] + r * gh[:, 2 * H:])
        h = (1.0 - z) * n + z * h
        logits = h @ params["wr_w"] + params["wr_b"]
        wid = jnp.argmax(logits, axis=1).astype(jnp.int32)
        toks.append(wid)
        lgs.append(logits)
        word = params["embed"][wid]
    return jnp.stack(toks, axis=1), jnp.stack(lgs, axis=1)


def make_params(key):
    ks = jax.random.split(key, 12)
    f = jnp.float32
    return {
        "embed": 0.1 * jax.random.normal(ks[0], (V, P), f),
        "v2m_w": 0.1 * jax.random.normal(ks[1], (E, P), f),
        "v2m_b": 0.1 * jax.random.normal(ks[2], (1, P), f),
        "w2m_w": 0.1 * jax.random.normal(ks[3], (P, P), f),
        "w2m_b": 0.1 * jax.random.normal(ks[4], (1, P), f),
        "wih":   0.1 * jax.random.normal(ks[5], (P, 3 * H), f),
        "bih":   0.1 * jax.random.normal(ks[6], (1, 3 * H), f),
        "whh":   0.1 * jax.random.normal(ks[7], (H, 3 * H), f),
        "bhh":   0.1 * jax.random.normal(ks[8], (1, 3 * H), f),
        "wr_w":  0.1 * jax.random.normal(ks[9], (H, V), f),
        "wr_b":  0.1 * jax.random.normal(ks[10], (1, V), f),
    }


if __name__ == "__main__":
    key = jax.random.PRNGKey(0)
    pkey, vkey = jax.random.split(key)
    params = make_params(pkey)
    video_encoded = jax.random.normal(vkey, (B, E), jnp.float32)

    tokens, logits = decoder_sample(video_encoded, params)
    jax.block_until_ready((tokens, logits))

    ref_tokens, ref_logits = decoder_sample_reference(video_encoded, params)
    assert tokens.shape == (B, T) and logits.shape == (B, T, V)
    # Folded weights change FP summation order slightly -> tolerance on logits.
    assert jnp.allclose(logits, ref_logits, atol=1e-4, rtol=1e-4)
    assert jnp.array_equal(tokens, ref_tokens), (tokens, ref_tokens)
    print("KERNEL_OK")
</pallas_src>

<mosaic_0001>
module attributes {stable_mosaic.version = 11 : i64} {
  func.func @decoder_kernel(%arg0: memref<2x32xf32, #tpu.memory_space<vmem>>, %arg1: memref<56x192xf32, #tpu.memory_space<vmem>>, %arg2: memref<32x96xf32, #tpu.memory_space<vmem>>, %arg3: memref<1x96xf32, #tpu.memory_space<vmem>>, %arg4: memref<1x96xf32, #tpu.memory_space<vmem>>, %arg5: memref<32x24xf32, #tpu.memory_space<vmem>>, %arg6: memref<1x24xf32, #tpu.memory_space<vmem>>, %arg7: memref<2x8xi32, #tpu.memory_space<vmem>>, %arg8: memref<8x2x24xf32, #tpu.memory_space<vmem>>) attributes {dimension_semantics = [], scalar_prefetch = 0 : i64, scratch_operands = 0 : i64, tpu.core_type = #tpu.core_type<tc>} {
    %c0 = arith.constant 0 : index
    %c0_0 = arith.constant 0 : index
    %0 = vector.load %arg0[%c0, %c0_0] : memref<2x32xf32, #tpu.memory_space<vmem>>, vector<2x32xf32>
    %c0_1 = arith.constant 0 : index
    %c0_2 = arith.constant 0 : index
    %1 = vector.load %arg2[%c0_1, %c0_2] : memref<32x96xf32, #tpu.memory_space<vmem>>, vector<32x96xf32>
    %cst = arith.constant dense<0.000000e+00> : vector<2x96xf32>
    %2 = tpu.matmul %0, %1, %cst {dimension_numbers = #tpu.dot_dimension_numbers<[1], [0], [0], [1], [0, 0, 1, 1], [], []>} : vector<2x32xf32>, vector<32x96xf32>, vector<2x96xf32> -> vector<2x96xf32>
    %c0_3 = arith.constant 0 : index
    %c0_4 = arith.constant 0 : index
    %3 = vector.load %arg3[%c0_3, %c0_4] : memref<1x96xf32, #tpu.memory_space<vmem>>, vector<1x96xf32>
    %4 = vector.broadcast %3 : vector<1x96xf32> to vector<2x96xf32>
    %5 = arith.addf %2, %4 : vector<2x96xf32>
    %c0_5 = arith.constant 0 : index
    %c0_6 = arith.constant 0 : index
    %6 = vector.load %arg1[%c0_5, %c0_6] : memref<56x192xf32, #tpu.memory_space<vmem>>, vector<56x192xf32>
    %c0_7 = arith.constant 0 : index
    %c0_8 = arith.constant 0 : index
    %7 = vector.load %arg4[%c0_7, %c0_8] : memref<1x96xf32, #tpu.memory_space<vmem>>, vector<1x96xf32>
    %c0_9 = arith.constant 0 : index
    %c0_10 = arith.constant 0 : index
    %8 = vector.load %arg5[%c0_9, %c0_10] : memref<32x24xf32, #tpu.memory_space<vmem>>, vector<32x24xf32>
    %c0_11 = arith.constant 0 : index
    %c0_12 = arith.constant 0 : index
    %9 = vector.load %arg6[%c0_11, %c0_12] : memref<1x24xf32, #tpu.memory_space<vmem>>, vector<1x24xf32>
    %10 = tpu.iota {dimensions = array<i32: 1>} : vector<2x24xi32>
    %11 = tpu.iota {dimensions = array<i32: 1>} : vector<2x8xi32>
    %12 = tpu.iota {dimensions = array<i32: 1>} : vector<2x56xi32>
    %c33_i32 = arith.constant 33 : i32
    %13 = vector.broadcast %c33_i32 : i32 to vector<2x56xi32>
    %14 = arith.cmpi eq, %12, %13 : vector<2x56xi32>
    %15 = arith.extui %14 : vector<2x56xi1> to vector<2x56xi32>
    %16 = arith.sitofp %15 : vector<2x56xi32> to vector<2x56xf32>
    %cst_13 = arith.constant 0.000000e+00 : f32
    %17 = vector.broadcast %cst_13 : f32 to vector<2x32xf32>
    %c0_i32 = arith.constant 0 : i32
    %18 = vector.broadcast %c0_i32 : i32 to vector<2x8xi32>
    %cst_14 = arith.constant dense<0.000000e+00> : vector<2x192xf32>
    %19 = tpu.matmul %16, %6, %cst_14 {dimension_numbers = #tpu.dot_dimension_numbers<[1], [0], [0], [1], [0, 0, 1, 1], [], []>} : vector<2x56xf32>, vector<56x192xf32>, vector<2x192xf32> -> vector<2x192xf32>
    %20 = vector.extract_strided_slice %19 {offsets = [0, 0], sizes = [2, 96], strides = [1, 1]} : vector<2x192xf32> to vector<2x96xf32>
    %21 = arith.addf %20, %5 : vector<2x96xf32>
    %22 = vector.extract_strided_slice %19 {offsets = [0, 96], sizes = [2, 96], strides = [1, 1]} : vector<2x192xf32> to vector<2x96xf32>
    %23 = vector.broadcast %7 : vector<1x96xf32> to vector<2x96xf32>
    %24 = arith.addf %22, %23 : vector<2x96xf32>
    %25 = vector.extract_strided_slice %21 {offsets = [0, 0], sizes = [2, 32], strides = [1, 1]} : vector<2x96xf32> to vector<2x32xf32>
    %26 = vector.extract_strided_slice %24 {offsets = [0, 0], sizes = [2, 32], strides = [1, 1]} : vector<2x96xf32> to vector<2x32xf32>
    %27 = arith.addf %25, %26 : vector<2x32xf32>
    %28 = arith.negf %27 : vector<2x32xf32>
    %29 = math.exp %28 : vector<2x32xf32>
    %cst_15 = arith.constant 1.000000e+00 : f32
    %30 = vector.broadcast %cst_15 : f32 to vector<2x32xf32>
    %31 = arith.addf %30, %29 : vector<2x32xf32>
    %32 = arith.divf %30, %31 : vector<2x32xf32>
    %33 = vector.extract_strided_slice %21 {offsets = [0, 32], sizes = [2, 32], strides = [1, 1]} : vector<2x96xf32> to vector<2x32xf32>
    %34 = vector.extract_strided_slice %24 {offsets = [0, 32], sizes = [2, 32], strides = [1, 1]} : vector<2x96xf32> to vector<2x32xf32>
    %35 = arith.addf %33, %34 : vector<2x32xf32>
    %36 = arith.negf %35 : vector<2x32xf32>
    %37 = math.exp %36 : vector<2x32xf32>
    %cst_16 = arith.constant 1.000000e+00 : f32
    %38 = vector.broadcast %cst_16 : f32 to vector<2x32xf32>
    %39 = arith.addf %38, %37 : vector<2x32xf32>
    %40 = arith.divf %38, %39 : vector<2x32xf32>
    %41 = vector.extract_strided_slice %21 {offsets = [0, 64], sizes = [2, 32], strides = [1, 1]} : vector<2x96xf32> to vector<2x32xf32>
    %42 = vector.extract_strided_slice %24 {offsets = [0, 64], sizes = [2, 32], strides = [1, 1]} : vector<2x96xf32> to vector<2x32xf32>
    %43 = arith.mulf %32, %42 : vector<2x32xf32>
    %44 = arith.addf %41, %43 : vector<2x32xf32>
    %45 = math.tanh %44 : vector<2x32xf32>
    %cst_17 = arith.constant 1.000000e+00 : f32
    %46 = vector.broadcast %cst_17 : f32 to vector<2x32xf32>
    %47 = arith.subf %46, %40 : vector<2x32xf32>
    %48 = arith.mulf %47, %45 : vector<2x32xf32>
    %49 = arith.mulf %40, %17 : vector<2x32xf32>
    %50 = arith.addf %48, %49 : vector<2x32xf32>
    %cst_18 = arith.constant dense<0.000000e+00> : vector<2x24xf32>
    %51 = tpu.matmul %50, %8, %cst_18 {dimension_numbers = #tpu.dot_dimension_numbers<[1], [0], [0], [1], [0, 0, 1, 1], [], []>} : vector<2x32xf32>, vector<32x24xf32>, vector<2x24xf32> -> vector<2x24xf32>
    %52 = vector.broadcast %9 : vector<1x24xf32> to vector<2x24xf32>
    %53 = arith.addf %51, %52 : vector<2x24xf32>
    %c0_19 = arith.constant 0 : index
    %c0_20 = arith.constant 0 : index
    %c0_21 = arith.constant 0 : index
    %54 = vector.load %arg8[%c0_19, %c0_20, %c0_21] : memref<8x2x24xf32, #tpu.memory_space<vmem>>, vector<1x2x24xf32>
    %55 = vector.shape_cast %54 : vector<1x2x24xf32> to vector<2x24xf32>
    %56 = vector.shape_cast %53 : vector<2x24xf32> to vector<1x2x24xf32>
    tpu.vector_store %arg8[%c0_19, %c0_20, %c0_21], %56 {strides = array<i32>} : memref<8x2x24xf32, #tpu.memory_space<vmem>>, vector<1x2x24xf32>,
    %cst_22 = arith.constant dense<0xFF800000> : vector<2xf32>
    %57 = vector.multi_reduction <maximumf>, %53, %cst_22 [1] : vector<2x24xf32> to vector<2xf32>
    %58 = vector.shape_cast %57 : vector<2xf32> to vector<2x1xf32>
    %59 = vector.broadcast %58 : vector<2x1xf32> to vector<2x24xf32>
    %60 = arith.cmpf oeq, %53, %59 : vector<2x24xf32>
    %c24_i32 = arith.constant 24 : i32
    %61 = vector.broadcast %c24_i32 : i32 to vector<2x24xi32>
    %62 = arith.select %60, %10, %61 : vector<2x24xi1>, vector<2x24xi32>
    %cst_23 = arith.constant dense<2147483647> : vector<2xi32>
    %63 = vector.multi_reduction <minsi>, %62, %cst_23 [1] : vector<2x24xi32> to vector<2xi32>
    %64 = vector.shape_cast %63 : vector<2xi32> to vector<2x1xi32>
    %c0_i32_24 = arith.constant 0 : i32
    %65 = vector.broadcast %c0_i32_24 : i32 to vector<2x8xi32>
    %66 = arith.cmpi eq, %11, %65 : vector<2x8xi32>
    %67 = vector.shape_cast %64 : vector<2x1xi32> to vector<2x1xi32>
    %68 = vector.broadcast %67 : vector<2x1xi32> to vector<2x8xi32>
    %69 = arith.select %66, %68, %18 : vector<2x8xi1>, vector<2x8xi32>
    %70 = vector.broadcast %64 : vector<2x1xi32> to vector<2x24xi32>
    %71 = arith.cmpi eq, %10, %70 : vector<2x24xi32>
    %72 = arith.extui %71 : vector<2x24xi1> to vector<2x24xi32>
    %73 = arith.sitofp %72 : vector<2x24xi32> to vector<2x24xf32>
    %74 = tpu.concatenate %50, %73 in 1 : vector<2x32xf32>, vector<2x24xf32> -> vector<2x56xf32>
    %cst_25 = arith.constant dense<0.000000e+00> : vector<2x192xf32>
    %75 = tpu.matmul %74, %6, %cst_25 {dimension_numbers = #tpu.dot_dimension_numbers<[1], [0], [0], [1], [0, 0, 1, 1], [], []>} : vector<2x56xf32>, vector<56x192xf32>, vector<2x192xf32> -> vector<2x192xf32>
    %76 = vector.extract_strided_slice %75 {offsets = [0, 0], sizes = [2, 96], strides = [1, 1]} : vector<2x192xf32> to vector<2x96xf32>
    %77 = arith.addf %76, %5 : vector<2x96xf32>
    %78 = vector.extract_strided_slice %75 {offsets = [0, 96], sizes = [2, 96], strides = [1, 1]} : vector<2x192xf32> to vector<2x96xf32>
    %79 = vector.broadcast %7 : vector<1x96xf32> to vector<2x96xf32>
    %80 = arith.addf %78, %79 : vector<2x96xf32>
    %81 = vector.extract_strided_slice %77 {offsets = [0, 0], sizes = [2, 32], strides = [1, 1]} : vector<2x96xf32> to vector<2x32xf32>
    %82 = vector.extract_strided_slice %80 {offsets = [0, 0], sizes = [2, 32], strides = [1, 1]} : vector<2x96xf32> to vector<2x32xf32>
    %83 = arith.addf %81, %82 : vector<2x32xf32>
    %84 = arith.negf %83 : vector<2x32xf32>
    %85 = math.exp %84 : vector<2x32xf32>
    %cst_26 = arith.constant 1.000000e+00 : f32
    %86 = vector.broadcast %cst_26 : f32 to vector<2x32xf32>
    %87 = arith.addf %86, %85 : vector<2x32xf32>
    %88 = arith.divf %86, %87 : vector<2x32xf32>
    %89 = vector.extract_strided_slice %77 {offsets = [0, 32], sizes = [2, 32], strides = [1, 1]} : vector<2x96xf32> to vector<2x32xf32>
    %90 = vector.extract_strided_slice %80 {offsets = [0, 32], sizes = [2, 32], strides = [1, 1]} : vector<2x96xf32> to vector<2x32xf32>
    %91 = arith.addf %89, %90 : vector<2x32xf32>
    %92 = arith.negf %91 : vector<2x32xf32>
    %93 = math.exp %92 : vector<2x32xf32>
    %cst_27 = arith.constant 1.000000e+00 : f32
    %94 = vector.broadcast %cst_27 : f32 to vector<2x32xf32>
    %95 = arith.addf %94, %93 : vector<2x32xf32>
    %96 = arith.divf %94, %95 : vector<2x32xf32>
    %97 = vector.extract_strided_slice %77 {offsets = [0, 64], sizes = [2, 32], strides = [1, 1]} : vector<2x96xf32> to vector<2x32xf32>
    %98 = vector.extract_strided_slice %80 {offsets = [0, 64], sizes = [2, 32], strides = [1, 1]} : vector<2x96xf32> to vector<2x32xf32>
    %99 = arith.mulf %88, %98 : vector<2x32xf32>
    %100 = arith.addf %97, %99 : vector<2x32xf32>
    %101 = math.tanh %100 : vector<2x32xf32>
    %cst_28 = arith.constant 1.000000e+00 : f32
    %102 = vector.broadcast %cst_28 : f32 to vector<2x32xf32>
    %103 = arith.subf %102, %96 : vector<2x32xf32>
    %104 = arith.mulf %103, %101 : vector<2x32xf32>
    %105 = arith.mulf %96, %50 : vector<2x32xf32>
    %106 = arith.addf %104, %105 : vector<2x32xf32>
    %cst_29 = arith.constant dense<0.000000e+00> : vector<2x24xf32>
    %107 = tpu.matmul %106, %8, %cst_29 {dimension_numbers = #tpu.dot_dimension_numbers<[1], [0], [0], [1], [0, 0, 1, 1], [], []>} : vector<2x32xf32>, vector<32x24xf32>, vector<2x24xf32> -> vector<2x24xf32>
    %108 = vector.broadcast %9 : vector<1x24xf32> to vector<2x24xf32>
    %109 = arith.addf %107, %108 : vector<2x24xf32>
    %c1 = arith.constant 1 : index
    %c0_30 = arith.constant 0 : index
    %c0_31 = arith.constant 0 : index
    %110 = vector.load %arg8[%c1, %c0_30, %c0_31] : memref<8x2x24xf32, #tpu.memory_space<vmem>>, vector<1x2x24xf32>
    %111 = vector.shape_cast %110 : vector<1x2x24xf32> to vector<2x24xf32>
    %112 = vector.shape_cast %109 : vector<2x24xf32> to vector<1x2x24xf32>
    tpu.vector_store %arg8[%c1, %c0_30, %c0_31], %112 {strides = array<i32>} : memref<8x2x24xf32, #tpu.memory_space<vmem>>, vector<1x2x24xf32>,
    %cst_32 = arith.constant dense<0xFF800000> : vector<2xf32>
    %113 = vector.multi_reduction <maximumf>, %109, %cst_32 [1] : vector<2x24xf32> to vector<2xf32>
    %114 = vector.shape_cast %113 : vector<2xf32> to vector<2x1xf32>
    %115 = vector.broadcast %114 : vector<2x1xf32> to vector<2x24xf32>
    %116 = arith.cmpf oeq, %109, %115 : vector<2x24xf32>
    %c24_i32_33 = arith.constant 24 : i32
    %117 = vector.broadcast %c24_i32_33 : i32 to vector<2x24xi32>
    %118 = arith.select %116, %10, %117 : vector<2x24xi1>, vector<2x24xi32>
    %cst_34 = arith.constant dense<2147483647> : vector<2xi32>
    %119 = vector.multi_reduction <minsi>, %118, %cst_34 [1] : vector<2x24xi32> to vector<2xi32>
    %120 = vector.shape_cast %119 : vector<2xi32> to vector<2x1xi32>
    %c1_i32 = arith.constant 1 : i32
    %121 = vector.broadcast %c1_i32 : i32 to vector<2x8xi32>
    %122 = arith.cmpi eq, %11, %121 : vector<2x8xi32>
    %123 = vector.shape_cast %120 : vector<2x1xi32> to vector<2x1xi32>
    %124 = vector.broadcast %123 : vector<2x1xi32> to vector<2x8xi32>
    %125 = arith.select %122, %124, %69 : vector<2x8xi1>, vector<2x8xi32>
    %126 = vector.broadcast %120 : vector<2x1xi32> to vector<2x24xi32>
    %127 = arith.cmpi eq, %10, %126 : vector<2x24xi32>
    %128 = arith.extui %127 : vector<2x24xi1> to vector<2x24xi32>
    %129 = arith.sitofp %128 : vector<2x24xi32> to vector<2x24xf32>
    %130 = tpu.concatenate %106, %129 in 1 : vector<2x32xf32>, vector<2x24xf32> -> vector<2x56xf32>
    %cst_35 = arith.constant dense<0.000000e+00> : vector<2x192xf32>
    %131 = tpu.matmul %130, %6, %cst_35 {dimension_numbers = #tpu.dot_dimension_numbers<[1], [0], [0], [1], [0, 0, 1, 1], [], []>} : vector<2x56xf32>, vector<56x192xf32>, vector<2x192xf32> -> vector<2x192xf32>
    %132 = vector.extract_strided_slice %131 {offsets = [0, 0], sizes = [2, 96], strides = [1, 1]} : vector<2x192xf32> to vector<2x96xf32>
    %133 = arith.addf %132, %5 : vector<2x96xf32>
    %134 = vector.extract_strided_slice %131 {offsets = [0, 96], sizes = [2, 96], strides = [1, 1]} : vector<2x192xf32> to vector<2x96xf32>
    %135 = vector.broadcast %7 : vector<1x96xf32> to vector<2x96xf32>
    %136 = arith.addf %134, %135 : vector<2x96xf32>
    %137 = vector.extract_strided_slice %133 {offsets = [0, 0], sizes = [2, 32], strides = [1, 1]} : vector<2x96xf32> to vector<2x32xf32>
    %138 = vector.extract_strided_slice %136 {offsets = [0, 0], sizes = [2, 32], strides = [1, 1]} : vector<2x96xf32> to vector<2x32xf32>
    %139 = arith.addf %137, %138 : vector<2x32xf32>
    %140 = arith.negf %139 : vector<2x32xf32>
    %141 = math.exp %140 : vector<2x32xf32>
    %cst_36 = arith.constant 1.000000e+00 : f32
    %142 = vector.broadcast %cst_36 : f32 to vector<2x32xf32>
    %143 = arith.addf %142, %141 : vector<2x32xf32>
    %144 = arith.divf %142, %143 : vector<2x32xf32>
    %145 = vector.extract_strided_slice %133 {offsets = [0, 32], sizes = [2, 32], strides = [1, 1]} : vector<2x96xf32> to vector<2x32xf32>
    %146 = vector.extract_strided_slice %136 {offsets = [0, 32], sizes = [2, 32], strides = [1, 1]} : vector<2x96xf32> to vector<2x32xf32>
    %147 = arith.addf %145, %146 : vector<2x32xf32>
    %148 = arith.negf %147 : vector<2x32xf32>
    %149 = math.exp %148 : vector<2x32xf32>
    %cst_37 = arith.constant 1.000000e+00 : f32
    %150 = vector.broadcast %cst_37 : f32 to vector<2x32xf32>
    %151 = arith.addf %150, %149 : vector<2x32xf32>
    %152 = arith.divf %150, %151 : vector<2x32xf32>
    %153 = vector.extract_strided_slice %133 {offsets = [0, 64], sizes = [2, 32], strides = [1, 1]} : vector<2x96xf32> to vector<2x32xf32>
    %154 = vector.extract_strided_slice %136 {offsets = [0, 64], sizes = [2, 32], strides = [1, 1]} : vector<2x96xf32> to vector<2x32xf32>
    %155 = arith.mulf %144, %154 : vector<2x32xf32>
    %156 = arith.addf %153, %155 : vector<2x32xf32>
    %157 = math.tanh %156 : vector<2x32xf32>
    %cst_38 = arith.constant 1.000000e+00 : f32
    %158 = vector.broadcast %cst_38 : f32 to vector<2x32xf32>
    %159 = arith.subf %158, %152 : vector<2x32xf32>
    %160 = arith.mulf %159, %157 : vector<2x32xf32>
    %161 = arith.mulf %152, %106 : vector<2x32xf32>
    %162 = arith.addf %160, %161 : vector<2x32xf32>
    %cst_39 = arith.constant dense<0.000000e+00> : vector<2x24xf32>
    %163 = tpu.matmul %162, %8, %cst_39 {dimension_numbers = #tpu.dot_dimension_numbers<[1], [0], [0], [1], [0, 0, 1, 1], [], []>} : vector<2x32xf32>, vector<32x24xf32>, vector<2x24xf32> -> vector<2x24xf32>
    %164 = vector.broadcast %9 : vector<1x24xf32> to vector<2x24xf32>
    %165 = arith.addf %163, %164 : vector<2x24xf32>
    %c2 = arith.constant 2 : index
    %c0_40 = arith.constant 0 : index
    %c0_41 = arith.constant 0 : index
    %166 = vector.load %arg8[%c2, %c0_40, %c0_41] : memref<8x2x24xf32, #tpu.memory_space<vmem>>, vector<1x2x24xf32>
    %167 = vector.shape_cast %166 : vector<1x2x24xf32> to vector<2x24xf32>
    %168 = vector.shape_cast %165 : vector<2x24xf32> to vector<1x2x24xf32>
    tpu.vector_store %arg8[%c2, %c0_40, %c0_41], %168 {strides = array<i32>} : memref<8x2x24xf32, #tpu.memory_space<vmem>>, vector<1x2x24xf32>,
    %cst_42 = arith.constant dense<0xFF800000> : vector<2xf32>
    %169 = vector.multi_reduction <maximumf>, %165, %cst_42 [1] : vector<2x24xf32> to vector<2xf32>
    %170 = vector.shape_cast %169 : vector<2xf32> to vector<2x1xf32>
    %171 = vector.broadcast %170 : vector<2x1xf32> to vector<2x24xf32>
    %172 = arith.cmpf oeq, %165, %171 : vector<2x24xf32>
    %c24_i32_43 = arith.constant 24 : i32
    %173 = vector.broadcast %c24_i32_43 : i32 to vector<2x24xi32>
    %174 = arith.select %172, %10, %173 : vector<2x24xi1>, vector<2x24xi32>
    %cst_44 = arith.constant dense<2147483647> : vector<2xi32>
    %175 = vector.multi_reduction <minsi>, %174, %cst_44 [1] : vector<2x24xi32> to vector<2xi32>
    %176 = vector.shape_cast %175 : vector<2xi32> to vector<2x1xi32>
    %c2_i32 = arith.constant 2 : i32
    %177 = vector.broadcast %c2_i32 : i32 to vector<2x8xi32>
    %178 = arith.cmpi eq, %11, %177 : vector<2x8xi32>
    %179 = vector.shape_cast %176 : vector<2x1xi32> to vector<2x1xi32>
    %180 = vector.broadcast %179 : vector<2x1xi32> to vector<2x8xi32>
    %181 = arith.select %178, %180, %125 : vector<2x8xi1>, vector<2x8xi32>
    %182 = vector.broadcast %176 : vector<2x1xi32> to vector<2x24xi32>
    %183 = arith.cmpi eq, %10, %182 : vector<2x24xi32>
    %184 = arith.extui %183 : vector<2x24xi1> to vector<2x24xi32>
    %185 = arith.sitofp %184 : vector<2x24xi32> to vector<2x24xf32>
    %186 = tpu.concatenate %162, %185 in 1 : vector<2x32xf32>, vector<2x24xf32> -> vector<2x56xf32>
    %cst_45 = arith.constant dense<0.000000e+00> : vector<2x192xf32>
    %187 = tpu.matmul %186, %6, %cst_45 {dimension_numbers = #tpu.dot_dimension_numbers<[1], [0], [0], [1], [0, 0, 1, 1], [], []>} : vector<2x56xf32>, vector<56x192xf32>, vector<2x192xf32> -> vector<2x192xf32>
    %188 = vector.extract_strided_slice %187 {offsets = [0, 0], sizes = [2, 96], strides = [1, 1]} : vector<2x192xf32> to vector<2x96xf32>
    %189 = arith.addf %188, %5 : vector<2x96xf32>
    %190 = vector.extract_strided_slice %187 {offsets = [0, 96], sizes = [2, 96], strides = [1, 1]} : vector<2x192xf32> to vector<2x96xf32>
    %191 = vector.broadcast %7 : vector<1x96xf32> to vector<2x96xf32>
    %192 = arith.addf %190, %191 : vector<2x96xf32>
    %193 = vector.extract_strided_slice %189 {offsets = [0, 0], sizes = [2, 32], strides = [1, 1]} : vector<2x96xf32> to vector<2x32xf32>
    %194 = vector.extract_strided_slice %192 {offsets = [0, 0], sizes = [2, 32], strides = [1, 1]} : vector<2x96xf32> to vector<2x32xf32>
    %195 = arith.addf %193, %194 : vector<2x32xf32>
    %196 = arith.negf %195 : vector<2x32xf32>
    %197 = math.exp %196 : vector<2x32xf32>
    %cst_46 = arith.constant 1.000000e+00 : f32
    %198 = vector.broadcast %cst_46 : f32 to vector<2x32xf32>
    %199 = arith.addf %198, %197 : vector<2x32xf32>
    %200 = arith.divf %198, %199 : vector<2x32xf32>
    %201 = vector.extract_strided_slice %189 {offsets = [0, 32], sizes = [2, 32], strides = [1, 1]} : vector<2x96xf32> to vector<2x32xf32>
    %202 = vector.extract_strided_slice %192 {offsets = [0, 32], sizes = [2, 32], strides = [1, 1]} : vector<2x96xf32> to vector<2x32xf32>
    %203 = arith.addf %201, %202 : vector<2x32xf32>
    %204 = arith.negf %203 : vector<2x32xf32>
    %205 = math.exp %204 : vector<2x32xf32>
    %cst_47 = arith.constant 1.000000e+00 : f32
    %206 = vector.broadcast %cst_47 : f32 to vector<2x32xf32>
    %207 = arith.addf %206, %205 : vector<2x32xf32>
    %208 = arith.divf %206, %207 : vector<2x32xf32>
    %209 = vector.extract_strided_slice %189 {offsets = [0, 64], sizes = [2, 32], strides = [1, 1]} : vector<2x96xf32> to vector<2x32xf32>
    %210 = vector.extract_strided_slice %192 {offsets = [0, 64], sizes = [2, 32], strides = [1, 1]} : vector<2x96xf32> to vector<2x32xf32>
    %211 = arith.mulf %200, %210 : vector<2x32xf32>
    %212 = arith.addf %209, %211 : vector<2x32xf32>
    %213 = math.tanh %212 : vector<2x32xf32>
    %cst_48 = arith.constant 1.000000e+00 : f32
    %214 = vector.broadcast %cst_48 : f32 to vector<2x32xf32>
    %215 = arith.subf %214, %208 : vector<2x32xf32>
    %216 = arith.mulf %215, %213 : vector<2x32xf32>
    %217 = arith.mulf %208, %162 : vector<2x32xf32>
    %218 = arith.addf %216, %217 : vector<2x32xf32>
    %cst_49 = arith.constant dense<0.000000e+00> : vector<2x24xf32>
    %219 = tpu.matmul %218, %8, %cst_49 {dimension_numbers = #tpu.dot_dimension_numbers<[1], [0], [0], [1], [0, 0, 1, 1], [], []>} : vector<2x32xf32>, vector<32x24xf32>, vector<2x24xf32> -> vector<2x24xf32>
    %220 = vector.broadcast %9 : vector<1x24xf32> to vector<2x24xf32>
    %221 = arith.addf %219, %220 : vector<2x24xf32>
    %c3 = arith.constant 3 : index
    %c0_50 = arith.constant 0 : index
    %c0_51 = arith.constant 0 : index
    %222 = vector.load %arg8[%c3, %c0_50, %c0_51] : memref<8x2x24xf32, #tpu.memory_space<vmem>>, vector<1x2x24xf32>
    %223 = vector.shape_cast %222 : vector<1x2x24xf32> to vector<2x24xf32>
    %224 = vector.shape_cast %221 : vector<2x24xf32> to vector<1x2x24xf32>
    tpu.vector_store %arg8[%c3, %c0_50, %c0_51], %224 {strides = array<i32>} : memref<8x2x24xf32, #tpu.memory_space<vmem>>, vector<1x2x24xf32>,
    %cst_52 = arith.constant dense<0xFF800000> : vector<2xf32>
    %225 = vector.multi_reduction <maximumf>, %221, %cst_52 [1] : vector<2x24xf32> to vector<2xf32>
    %226 = vector.shape_cast %225 : vector<2xf32> to vector<2x1xf32>
    %227 = vector.broadcast %226 : vector<2x1xf32> to vector<2x24xf32>
    %228 = arith.cmpf oeq, %221, %227 : vector<2x24xf32>
    %c24_i32_53 = arith.constant 24 : i32
    %229 = vector.broadcast %c24_i32_53 : i32 to vector<2x24xi32>
    %230 = arith.select %228, %10, %229 : vector<2x24xi1>, vector<2x24xi32>
    %cst_54 = arith.constant dense<2147483647> : vector<2xi32>
    %231 = vector.multi_reduction <minsi>, %230, %cst_54 [1] : vector<2x24xi32> to vector<2xi32>
    %232 = vector.shape_cast %231 : vector<2xi32> to vector<2x1xi32>
    %c3_i32 = arith.constant 3 : i32
    %233 = vector.broadcast %c3_i32 : i32 to vector<2x8xi32>
    %234 = arith.cmpi eq, %11, %233 : vector<2x8xi32>
    %235 = vector.shape_cast %232 : vector<2x1xi32> to vector<2x1xi32>
    %236 = vector.broadcast %235 : vector<2x1xi32> to vector<2x8xi32>
    %237 = arith.select %234, %236, %181 : vector<2x8xi1>, vector<2x8xi32>
    %238 = vector.broadcast %232 : vector<2x1xi32> to vector<2x24xi32>
    %239 = arith.cmpi eq, %10, %238 : vector<2x24xi32>
    %240 = arith.extui %239 : vector<2x24xi1> to vector<2x24xi32>
    %241 = arith.sitofp %240 : vector<2x24xi32> to vector<2x24xf32>
    %242 = tpu.concatenate %218, %241 in 1 : vector<2x32xf32>, vector<2x24xf32> -> vector<2x56xf32>
    %cst_55 = arith.constant dense<0.000000e+00> : vector<2x192xf32>
    %243 = tpu.matmul %242, %6, %cst_55 {dimension_numbers = #tpu.dot_dimension_numbers<[1], [0], [0], [1], [0, 0, 1, 1], [], []>} : vector<2x56xf32>, vector<56x192xf32>, vector<2x192xf32> -> vector<2x192xf32>
    %244 = vector.extract_strided_slice %243 {offsets = [0, 0], sizes = [2, 96], strides = [1, 1]} : vector<2x192xf32> to vector<2x96xf32>
    %245 = arith.addf %244, %5 : vector<2x96xf32>
    %246 = vector.extract_strided_slice %243 {offsets = [0, 96], sizes = [2, 96], strides = [1, 1]} : vector<2x192xf32> to vector<2x96xf32>
    %247 = vector.broadcast %7 : vector<1x96xf32> to vector<2x96xf32>
    %248 = arith.addf %246, %247 : vector<2x96xf32>
    %249 = vector.extract_strided_slice %245 {offsets = [0, 0], sizes = [2, 32], strides = [1, 1]} : vector<2x96xf32> to vector<2x32xf32>
    %250 = vector.extract_strided_slice %248 {offsets = [0, 0], sizes = [2, 32], strides = [1, 1]} : vector<2x96xf32> to vector<2x32xf32>
    %251 = arith.addf %249, %250 : vector<2x32xf32>
    %252 = arith.negf %251 : vector<2x32xf32>
    %253 = math.exp %252 : vector<2x32xf32>
    %cst_56 = arith.constant 1.000000e+00 : f32
    %254 = vector.broadcast %cst_56 : f32 to vector<2x32xf32>
    %255 = arith.addf %254, %253 : vector<2x32xf32>
    %256 = arith.divf %254, %255 : vector<2x32xf32>
    %257 = vector.extract_strided_slice %245 {offsets = [0, 32], sizes = [2, 32], strides = [1, 1]} : vector<2x96xf32> to vector<2x32xf32>
    %258 = vector.extract_strided_slice %248 {offsets = [0, 32], sizes = [2, 32], strides = [1, 1]} : vector<2x96xf32> to vector<2x32xf32>
    %259 = arith.addf %257, %258 : vector<2x32xf32>
    %260 = arith.negf %259 : vector<2x32xf32>
    %261 = math.exp %260 : vector<2x32xf32>
    %cst_57 = arith.constant 1.000000e+00 : f32
    %262 = vector.broadcast %cst_57 : f32 to vector<2x32xf32>
    %263 = arith.addf %262, %261 : vector<2x32xf32>
    %264 = arith.divf %262, %263 : vector<2x32xf32>
    %265 = vector.extract_strided_slice %245 {offsets = [0, 64], sizes = [2, 32], strides = [1, 1]} : vector<2x96xf32> to vector<2x32xf32>
    %266 = vector.extract_strided_slice %248 {offsets = [0, 64], sizes = [2, 32], strides = [1, 1]} : vector<2x96xf32> to vector<2x32xf32>
    %267 = arith.mulf %256, %266 : vector<2x32xf32>
    %268 = arith.addf %265, %267 : vector<2x32xf32>
    %269 = math.tanh %268 : vector<2x32xf32>
    %cst_58 = arith.constant 1.000000e+00 : f32
    %270 = vector.broadcast %cst_58 : f32 to vector<2x32xf32>
    %271 = arith.subf %270, %264 : vector<2x32xf32>
    %272 = arith.mulf %271, %269 : vector<2x32xf32>
    %273 = arith.mulf %264, %218 : vector<2x32xf32>
    %274 = arith.addf %272, %273 : vector<2x32xf32>
    %cst_59 = arith.constant dense<0.000000e+00> : vector<2x24xf32>
    %275 = tpu.matmul %274, %8, %cst_59 {dimension_numbers = #tpu.dot_dimension_numbers<[1], [0], [0], [1], [0, 0, 1, 1], [], []>} : vector<2x32xf32>, vector<32x24xf32>, vector<2x24xf32> -> vector<2x24xf32>
    %276 = vector.broadcast %9 : vector<1x24xf32> to vector<2x24xf32>
    %277 = arith.addf %275, %276 : vector<2x24xf32>
    %c4 = arith.constant 4 : index
    %c0_60 = arith.constant 0 : index
    %c0_61 = arith.constant 0 : index
    %278 = vector.load %arg8[%c4, %c0_60, %c0_61] : memref<8x2x24xf32, #tpu.memory_space<vmem>>, vector<1x2x24xf32>
    %279 = vector.shape_cast %278 : vector<1x2x24xf32> to vector<2x24xf32>
    %280 = vector.shape_cast %277 : vector<2x24xf32> to vector<1x2x24xf32>
    tpu.vector_store %arg8[%c4, %c0_60, %c0_61], %280 {strides = array<i32>} : memref<8x2x24xf32, #tpu.memory_space<vmem>>, vector<1x2x24xf32>,
    %cst_62 = arith.constant dense<0xFF800000> : vector<2xf32>
    %281 = vector.multi_reduction <maximumf>, %277, %cst_62 [1] : vector<2x24xf32> to vector<2xf32>
    %282 = vector.shape_cast %281 : vector<2xf32> to vector<2x1xf32>
    %283 = vector.broadcast %282 : vector<2x1xf32> to vector<2x24xf32>
    %284 = arith.cmpf oeq, %277, %283 : vector<2x24xf32>
    %c24_i32_63 = arith.constant 24 : i32
    %285 = vector.broadcast %c24_i32_63 : i32 to vector<2x24xi32>
    %286 = arith.select %284, %10, %285 : vector<2x24xi1>, vector<2x24xi32>
    %cst_64 = arith.constant dense<2147483647> : vector<2xi32>
    %287 = vector.multi_reduction <minsi>, %286, %cst_64 [1] : vector<2x24xi32> to vector<2xi32>
    %288 = vector.shape_cast %287 : vector<2xi32> to vector<2x1xi32>
    %c4_i32 = arith.constant 4 : i32
    %289 = vector.broadcast %c4_i32 : i32 to vector<2x8xi32>
    %290 = arith.cmpi eq, %11, %289 : vector<2x8xi32>
    %291 = vector.shape_cast %288 : vector<2x1xi32> to vector<2x1xi32>
    %292 = vector.broadcast %291 : vector<2x1xi32> to vector<2x8xi32>
    %293 = arith.select %290, %292, %237 : vector<2x8xi1>, vector<2x8xi32>
    %294 = vector.broadcast %288 : vector<2x1xi32> to vector<2x24xi32>
    %295 = arith.cmpi eq, %10, %294 : vector<2x24xi32>
    %296 = arith.extui %295 : vector<2x24xi1> to vector<2x24xi32>
    %297 = arith.sitofp %296 : vector<2x24xi32> to vector<2x24xf32>
    %298 = tpu.concatenate %274, %297 in 1 : vector<2x32xf32>, vector<2x24xf32> -> vector<2x56xf32>
    %cst_65 = arith.constant dense<0.000000e+00> : vector<2x192xf32>
    %299 = tpu.matmul %298, %6, %cst_65 {dimension_numbers = #tpu.dot_dimension_numbers<[1], [0], [0], [1], [0, 0, 1, 1], [], []>} : vector<2x56xf32>, vector<56x192xf32>, vector<2x192xf32> -> vector<2x192xf32>
    %300 = vector.extract_strided_slice %299 {offsets = [0, 0], sizes = [2, 96], strides = [1, 1]} : vector<2x192xf32> to vector<2x96xf32>
    %301 = arith.addf %300, %5 : vector<2x96xf32>
    %302 = vector.extract_strided_slice %299 {offsets = [0, 96], sizes = [2, 96], strides = [1, 1]} : vector<2x192xf32> to vector<2x96xf32>
    %303 = vector.broadcast %7 : vector<1x96xf32> to vector<2x96xf32>
    %304 = arith.addf %302, %303 : vector<2x96xf32>
    %305 = vector.extract_strided_slice %301 {offsets = [0, 0], sizes = [2, 32], strides = [1, 1]} : vector<2x96xf32> to vector<2x32xf32>
    %306 = vector.extract_strided_slice %304 {offsets = [0, 0], sizes = [2, 32], strides = [1, 1]} : vector<2x96xf32> to vector<2x32xf32>
    %307 = arith.addf %305, %306 : vector<2x32xf32>
    %308 = arith.negf %307 : vector<2x32xf32>
    %309 = math.exp %308 : vector<2x32xf32>
    %cst_66 = arith.constant 1.000000e+00 : f32
    %310 = vector.broadcast %cst_66 : f32 to vector<2x32xf32>
    %311 = arith.addf %310, %309 : vector<2x32xf32>
    %312 = arith.divf %310, %311 : vector<2x32xf32>
    %313 = vector.extract_strided_slice %301 {offsets = [0, 32], sizes = [2, 32], strides = [1, 1]} : vector<2x96xf32> to vector<2x32xf32>
    %314 = vector.extract_strided_slice %304 {offsets = [0, 32], sizes = [2, 32], strides = [1, 1]} : vector<2x96xf32> to vector<2x32xf32>
    %315 = arith.addf %313, %314 : vector<2x32xf32>
    %316 = arith.negf %315 : vector<2x32xf32>
    %317 = math.exp %316 : vector<2x32xf32>
    %cst_67 = arith.constant 1.000000e+00 : f32
    %318 = vector.broadcast %cst_67 : f32 to vector<2x32xf32>
    %319 = arith.addf %318, %317 : vector<2x32xf32>
    %320 = arith.divf %318, %319 : vector<2x32xf32>
    %321 = vector.extract_strided_slice %301 {offsets = [0, 64], sizes = [2, 32], strides = [1, 1]} : vector<2x96xf32> to vector<2x32xf32>
    %322 = vector.extract_strided_slice %304 {offsets = [0, 64], sizes = [2, 32], strides = [1, 1]} : vector<2x96xf32> to vector<2x32xf32>
    %323 = arith.mulf %312, %322 : vector<2x32xf32>
    %324 = arith.addf %321, %323 : vector<2x32xf32>
    %325 = math.tanh %324 : vector<2x32xf32>
    %cst_68 = arith.constant 1.000000e+00 : f32
    %326 = vector.broadcast %cst_68 : f32 to vector<2x32xf32>
    %327 = arith.subf %326, %320 : vector<2x32xf32>
    %328 = arith.mulf %327, %325 : vector<2x32xf32>
    %329 = arith.mulf %320, %274 : vector<2x32xf32>
    %330 = arith.addf %328, %329 : vector<2x32xf32>
    %cst_69 = arith.constant dense<0.000000e+00> : vector<2x24xf32>
    %331 = tpu.matmul %330, %8, %cst_69 {dimension_numbers = #tpu.dot_dimension_numbers<[1], [0], [0], [1], [0, 0, 1, 1], [], []>} : vector<2x32xf32>, vector<32x24xf32>, vector<2x24xf32> -> vector<2x24xf32>
    %332 = vector.broadcast %9 : vector<1x24xf32> to vector<2x24xf32>
    %333 = arith.addf %331, %332 : vector<2x24xf32>
    %c5 = arith.constant 5 : index
    %c0_70 = arith.constant 0 : index
    %c0_71 = arith.constant 0 : index
    %334 = vector.load %arg8[%c5, %c0_70, %c0_71] : memref<8x2x24xf32, #tpu.memory_space<vmem>>, vector<1x2x24xf32>
    %335 = vector.shape_cast %334 : vector<1x2x24xf32> to vector<2x24xf32>
    %336 = vector.shape_cast %333 : vector<2x24xf32> to vector<1x2x24xf32>
    tpu.vector_store %arg8[%c5, %c0_70, %c0_71], %336 {strides = array<i32>} : memref<8x2x24xf32, #tpu.memory_space<vmem>>, vector<1x2x24xf32>,
    %cst_72 = arith.constant dense<0xFF800000> : vector<2xf32>
    %337 = vector.multi_reduction <maximumf>, %333, %cst_72 [1] : vector<2x24xf32> to vector<2xf32>
    %338 = vector.shape_cast %337 : vector<2xf32> to vector<2x1xf32>
    %339 = vector.broadcast %338 : vector<2x1xf32> to vector<2x24xf32>
    %340 = arith.cmpf oeq, %333, %339 : vector<2x24xf32>
    %c24_i32_73 = arith.constant 24 : i32
    %341 = vector.broadcast %c24_i32_73 : i32 to vector<2x24xi32>
    %342 = arith.select %340, %10, %341 : vector<2x24xi1>, vector<2x24xi32>
    %cst_74 = arith.constant dense<2147483647> : vector<2xi32>
    %343 = vector.multi_reduction <minsi>, %342, %cst_74 [1] : vector<2x24xi32> to vector<2xi32>
    %344 = vector.shape_cast %343 : vector<2xi32> to vector<2x1xi32>
    %c5_i32 = arith.constant 5 : i32
    %345 = vector.broadcast %c5_i32 : i32 to vector<2x8xi32>
    %346 = arith.cmpi eq, %11, %345 : vector<2x8xi32>
    %347 = vector.shape_cast %344 : vector<2x1xi32> to vector<2x1xi32>
    %348 = vector.broadcast %347 : vector<2x1xi32> to vector<2x8xi32>
    %349 = arith.select %346, %348, %293 : vector<2x8xi1>, vector<2x8xi32>
    %350 = vector.broadcast %344 : vector<2x1xi32> to vector<2x24xi32>
    %351 = arith.cmpi eq, %10, %350 : vector<2x24xi32>
    %352 = arith.extui %351 : vector<2x24xi1> to vector<2x24xi32>
    %353 = arith.sitofp %352 : vector<2x24xi32> to vector<2x24xf32>
    %354 = tpu.concatenate %330, %353 in 1 : vector<2x32xf32>, vector<2x24xf32> -> vector<2x56xf32>
    %cst_75 = arith.constant dense<0.000000e+00> : vector<2x192xf32>
    %355 = tpu.matmul %354, %6, %cst_75 {dimension_numbers = #tpu.dot_dimension_numbers<[1], [0], [0], [1], [0, 0, 1, 1], [], []>} : vector<2x56xf32>, vector<56x192xf32>, vector<2x192xf32> -> vector<2x192xf32>
    %356 = vector.extract_strided_slice %355 {offsets = [0, 0], sizes = [2, 96], strides = [1, 1]} : vector<2x192xf32> to vector<2x96xf32>
    %357 = arith.addf %356, %5 : vector<2x96xf32>
    %358 = vector.extract_strided_slice %355 {offsets = [0, 96], sizes = [2, 96], strides = [1, 1]} : vector<2x192xf32> to vector<2x96xf32>
    %359 = vector.broadcast %7 : vector<1x96xf32> to vector<2x96xf32>
    %360 = arith.addf %358, %359 : vector<2x96xf32>
    %361 = vector.extract_strided_slice %357 {offsets = [0, 0], sizes = [2, 32], strides = [1, 1]} : vector<2x96xf32> to vector<2x32xf32>
    %362 = vector.extract_strided_slice %360 {offsets = [0, 0], sizes = [2, 32], strides = [1, 1]} : vector<2x96xf32> to vector<2x32xf32>
    %363 = arith.addf %361, %362 : vector<2x32xf32>
    %364 = arith.negf %363 : vector<2x32xf32>
    %365 = math.exp %364 : vector<2x32xf32>
    %cst_76 = arith.constant 1.000000e+00 : f32
    %366 = vector.broadcast %cst_76 : f32 to vector<2x32xf32>
    %367 = arith.addf %366, %365 : vector<2x32xf32>
    %368 = arith.divf %366, %367 : vector<2x32xf32>
    %369 = vector.extract_strided_slice %357 {offsets = [0, 32], sizes = [2, 32], strides = [1, 1]} : vector<2x96xf32> to vector<2x32xf32>
    %370 = vector.extract_strided_slice %360 {offsets = [0, 32], sizes = [2, 32], strides = [1, 1]} : vector<2x96xf32> to vector<2x32xf32>
    %371 = arith.addf %369, %370 : vector<2x32xf32>
    %372 = arith.negf %371 : vector<2x32xf32>
    %373 = math.exp %372 : vector<2x32xf32>
    %cst_77 = arith.constant 1.000000e+00 : f32
    %374 = vector.broadcast %cst_77 : f32 to vector<2x32xf32>
    %375 = arith.addf %374, %373 : vector<2x32xf32>
    %376 = arith.divf %374, %375 : vector<2x32xf32>
    %377 = vector.extract_strided_slice %357 {offsets = [0, 64], sizes = [2, 32], strides = [1, 1]} : vector<2x96xf32> to vector<2x32xf32>
    %378 = vector.extract_strided_slice %360 {offsets = [0, 64], sizes = [2, 32], strides = [1, 1]} : vector<2x96xf32> to vector<2x32xf32>
    %379 = arith.mulf %368, %378 : vector<2x32xf32>
    %380 = arith.addf %377, %379 : vector<2x32xf32>
    %381 = math.tanh %380 : vector<2x32xf32>
    %cst_78 = arith.constant 1.000000e+00 : f32
    %382 = vector.broadcast %cst_78 : f32 to vector<2x32xf32>
    %383 = arith.subf %382, %376 : vector<2x32xf32>
    %384 = arith.mulf %383, %381 : vector<2x32xf32>
    %385 = arith.mulf %376, %330 : vector<2x32xf32>
    %386 = arith.addf %384, %385 : vector<2x32xf32>
    %cst_79 = arith.constant dense<0.000000e+00> : vector<2x24xf32>
    %387 = tpu.matmul %386, %8, %cst_79 {dimension_numbers = #tpu.dot_dimension_numbers<[1], [0], [0], [1], [0, 0, 1, 1], [], []>} : vector<2x32xf32>, vector<32x24xf32>, vector<2x24xf32> -> vector<2x24xf32>
    %388 = vector.broadcast %9 : vector<1x24xf32> to vector<2x24xf32>
    %389 = arith.addf %387, %388 : vector<2x24xf32>
    %c6 = arith.constant 6 : index
    %c0_80 = arith.constant 0 : index
    %c0_81 = arith.constant 0 : index
    %390 = vector.load %arg8[%c6, %c0_80, %c0_81] : memref<8x2x24xf32, #tpu.memory_space<vmem>>, vector<1x2x24xf32>
    %391 = vector.shape_cast %390 : vector<1x2x24xf32> to vector<2x24xf32>
    %392 = vector.shape_cast %389 : vector<2x24xf32> to vector<1x2x24xf32>
    tpu.vector_store %arg8[%c6, %c0_80, %c0_81], %392 {strides = array<i32>} : memref<8x2x24xf32, #tpu.memory_space<vmem>>, vector<1x2x24xf32>,
    %cst_82 = arith.constant dense<0xFF800000> : vector<2xf32>
    %393 = vector.multi_reduction <maximumf>, %389, %cst_82 [1] : vector<2x24xf32> to vector<2xf32>
    %394 = vector.shape_cast %393 : vector<2xf32> to vector<2x1xf32>
    %395 = vector.broadcast %394 : vector<2x1xf32> to vector<2x24xf32>
    %396 = arith.cmpf oeq, %389, %395 : vector<2x24xf32>
    %c24_i32_83 = arith.constant 24 : i32
    %397 = vector.broadcast %c24_i32_83 : i32 to vector<2x24xi32>
    %398 = arith.select %396, %10, %397 : vector<2x24xi1>, vector<2x24xi32>
    %cst_84 = arith.constant dense<2147483647> : vector<2xi32>
    %399 = vector.multi_reduction <minsi>, %398, %cst_84 [1] : vector<2x24xi32> to vector<2xi32>
    %400 = vector.shape_cast %399 : vector<2xi32> to vector<2x1xi32>
    %c6_i32 = arith.constant 6 : i32
    %401 = vector.broadcast %c6_i32 : i32 to vector<2x8xi32>
    %402 = arith.cmpi eq, %11, %401 : vector<2x8xi32>
    %403 = vector.shape_cast %400 : vector<2x1xi32> to vector<2x1xi32>
    %404 = vector.broadcast %403 : vector<2x1xi32> to vector<2x8xi32>
    %405 = arith.select %402, %404, %349 : vector<2x8xi1>, vector<2x8xi32>
    %406 = vector.broadcast %400 : vector<2x1xi32> to vector<2x24xi32>
    %407 = arith.cmpi eq, %10, %406 : vector<2x24xi32>
    %408 = arith.extui %407 : vector<2x24xi1> to vector<2x24xi32>
    %409 = arith.sitofp %408 : vector<2x24xi32> to vector<2x24xf32>
    %410 = tpu.concatenate %386, %409 in 1 : vector<2x32xf32>, vector<2x24xf32> -> vector<2x56xf32>
    %cst_85 = arith.constant dense<0.000000e+00> : vector<2x192xf32>
    %411 = tpu.matmul %410, %6, %cst_85 {dimension_numbers = #tpu.dot_dimension_numbers<[1], [0], [0], [1], [0, 0, 1, 1], [], []>} : vector<2x56xf32>, vector<56x192xf32>, vector<2x192xf32> -> vector<2x192xf32>
    %412 = vector.extract_strided_slice %411 {offsets = [0, 0], sizes = [2, 96], strides = [1, 1]} : vector<2x192xf32> to vector<2x96xf32>
    %413 = arith.addf %412, %5 : vector<2x96xf32>
    %414 = vector.extract_strided_slice %411 {offsets = [0, 96], sizes = [2, 96], strides = [1, 1]} : vector<2x192xf32> to vector<2x96xf32>
    %415 = vector.broadcast %7 : vector<1x96xf32> to vector<2x96xf32>
    %416 = arith.addf %414, %415 : vector<2x96xf32>
    %417 = vector.extract_strided_slice %413 {offsets = [0, 0], sizes = [2, 32], strides = [1, 1]} : vector<2x96xf32> to vector<2x32xf32>
    %418 = vector.extract_strided_slice %416 {offsets = [0, 0], sizes = [2, 32], strides = [1, 1]} : vector<2x96xf32> to vector<2x32xf32>
    %419 = arith.addf %417, %418 : vector<2x32xf32>
    %420 = arith.negf %419 : vector<2x32xf32>
    %421 = math.exp %420 : vector<2x32xf32>
    %cst_86 = arith.constant 1.000000e+00 : f32
    %422 = vector.broadcast %cst_86 : f32 to vector<2x32xf32>
    %423 = arith.addf %422, %421 : vector<2x32xf32>
    %424 = arith.divf %422, %423 : vector<2x32xf32>
    %425 = vector.extract_strided_slice %413 {offsets = [0, 32], sizes = [2, 32], strides = [1, 1]} : vector<2x96xf32> to vector<2x32xf32>
    %426 = vector.extract_strided_slice %416 {offsets = [0, 32], sizes = [2, 32], strides = [1, 1]} : vector<2x96xf32> to vector<2x32xf32>
    %427 = arith.addf %425, %426 : vector<2x32xf32>
    %428 = arith.negf %427 : vector<2x32xf32>
    %429 = math.exp %428 : vector<2x32xf32>
    %cst_87 = arith.constant 1.000000e+00 : f32
    %430 = vector.broadcast %cst_87 : f32 to vector<2x32xf32>
    %431 = arith.addf %430, %429 : vector<2x32xf32>
    %432 = arith.divf %430, %431 : vector<2x32xf32>
    %433 = vector.extract_strided_slice %413 {offsets = [0, 64], sizes = [2, 32], strides = [1, 1]} : vector<2x96xf32> to vector<2x32xf32>
    %434 = vector.extract_strided_slice %416 {offsets = [0, 64], sizes = [2, 32], strides = [1, 1]} : vector<2x96xf32> to vector<2x32xf32>
    %435 = arith.mulf %424, %434 : vector<2x32xf32>
    %436 = arith.addf %433, %435 : vector<2x32xf32>
    %437 = math.tanh %436 : vector<2x32xf32>
    %cst_88 = arith.constant 1.000000e+00 : f32
    %438 = vector.broadcast %cst_88 : f32 to vector<2x32xf32>
    %439 = arith.subf %438, %432 : vector<2x32xf32>
    %440 = arith.mulf %439, %437 : vector<2x32xf32>
    %441 = arith.mulf %432, %386 : vector<2x32xf32>
    %442 = arith.addf %440, %441 : vector<2x32xf32>
    %cst_89 = arith.constant dense<0.000000e+00> : vector<2x24xf32>
    %443 = tpu.matmul %442, %8, %cst_89 {dimension_numbers = #tpu.dot_dimension_numbers<[1], [0], [0], [1], [0, 0, 1, 1], [], []>} : vector<2x32xf32>, vector<32x24xf32>, vector<2x24xf32> -> vector<2x24xf32>
    %444 = vector.broadcast %9 : vector<1x24xf32> to vector<2x24xf32>
    %445 = arith.addf %443, %444 : vector<2x24xf32>
    %c7 = arith.constant 7 : index
    %c0_90 = arith.constant 0 : index
    %c0_91 = arith.constant 0 : index
    %446 = vector.load %arg8[%c7, %c0_90, %c0_91] : memref<8x2x24xf32, #tpu.memory_space<vmem>>, vector<1x2x24xf32>
    %447 = vector.shape_cast %446 : vector<1x2x24xf32> to vector<2x24xf32>
    %448 = vector.shape_cast %445 : vector<2x24xf32> to vector<1x2x24xf32>
    tpu.vector_store %arg8[%c7, %c0_90, %c0_91], %448 {strides = array<i32>} : memref<8x2x24xf32, #tpu.memory_space<vmem>>, vector<1x2x24xf32>,
    %cst_92 = arith.constant dense<0xFF800000> : vector<2xf32>
    %449 = vector.multi_reduction <maximumf>, %445, %cst_92 [1] : vector<2x24xf32> to vector<2xf32>
    %450 = vector.shape_cast %449 : vector<2xf32> to vector<2x1xf32>
    %451 = vector.broadcast %450 : vector<2x1xf32> to vector<2x24xf32>
    %452 = arith.cmpf oeq, %445, %451 : vector<2x24xf32>
    %c24_i32_93 = arith.constant 24 : i32
    %453 = vector.broadcast %c24_i32_93 : i32 to vector<2x24xi32>
    %454 = arith.select %452, %10, %453 : vector<2x24xi1>, vector<2x24xi32>
    %cst_94 = arith.constant dense<2147483647> : vector<2xi32>
    %455 = vector.multi_reduction <minsi>, %454, %cst_94 [1] : vector<2x24xi32> to vector<2xi32>
    %456 = vector.shape_cast %455 : vector<2xi32> to vector<2x1xi32>
    %c7_i32 = arith.constant 7 : i32
    %457 = vector.broadcast %c7_i32 : i32 to vector<2x8xi32>
    %458 = arith.cmpi eq, %11, %457 : vector<2x8xi32>
    %459 = vector.shape_cast %456 : vector<2x1xi32> to vector<2x1xi32>
    %460 = vector.broadcast %459 : vector<2x1xi32> to vector<2x8xi32>
    %461 = arith.select %458, %460, %405 : vector<2x8xi1>, vector<2x8xi32>
    %c0_95 = arith.constant 0 : index
    %c0_96 = arith.constant 0 : index
    %462 = vector.load %arg7[%c0_95, %c0_96] : memref<2x8xi32, #tpu.memory_space<vmem>>, vector<2x8xi32>
    tpu.vector_store %arg7[%c0_95, %c0_96], %461 {strides = array<i32>} : memref<2x8xi32, #tpu.memory_space<vmem>>, vector<2x8xi32>,
    return
  }
}

</mosaic_0001>

<llo_original>
// kernel: tpu_custom_call.1
$region0: #{tpu_custom_call.1}
  #allocation0 [shape = 'u32[]', space=smem, size = 0x4, offset = 0x4, fixed_abs, tag = 'smem constant byte address 0x4 - core index']
  #allocation1 [shape = 'u32[72,128]{1,0:T(1,128)}', space=vmem, size = 0x9000, scoped, tag = 'internal scratch']
  %s0 = inlined_call_operand.vmem [shape: f32[2,32], index: 0, kind: input, shape index: {}]
  %s1 = inlined_call_operand.hbm [shape: f32[56,192], index: 1, kind: input, shape index: {}]
  %s2 = inlined_call_operand.vmem [shape: f32[32,96], index: 2, kind: input, shape index: {}]
  %s3 = inlined_call_operand.vmem [shape: f32[1,96], index: 3, kind: input, shape index: {}]
  %s4 = inlined_call_operand.vmem [shape: f32[1,96], index: 4, kind: input, shape index: {}]
  %s5 = inlined_call_operand.vmem [shape: f32[32,24], index: 5, kind: input, shape index: {}]
  %s6 = inlined_call_operand.vmem [shape: f32[1,24], index: 6, kind: input, shape index: {}]
  %s7 = inlined_call_operand.hbm [shape: s32[2,8], index: 7, kind: output, shape index: {0}]
  %s8 = inlined_call_operand.hbm [shape: f32[8,2,24], index: 8, kind: output, shape index: {1}]
  %9 = xla_tuple %s7, %s8
  %s10 = sld [smem:[#allocation0]]
  $region50: #{tpu_custom_call.1} parent=0
    _
  %s12 = ssub.s32 1, %s10
  %s13 = scalar_select 0, %s12, %s10
  $region1: #{tpu_custom_call.1} parent=0
    #allocation2 [shape = 'u8[57344]{0}', space=vmem, size = 0xe000, scoped, tag = 'input window, operand 1, single buffered']
    #allocation3 [shape = 's32[1]{0}', space=sflag, size = 0x4, scoped, tag = 'scoped memory for tpu_custom_call.1']
    #allocation4 [shape = 's32[1]{0}', space=sflag, size = 0x4, scoped, tag = 'scoped memory for tpu_custom_call.1']
    #allocation5 [shape = 'u8[1024]{0}', space=vmem, size = 0x400, scoped, tag = 'output window, operand 0, single buffered']
    #allocation6 [shape = 'u8[8192]{0}', space=vmem, size = 0x2000, scoped, tag = 'output window, operand 1, single buffered']
    #allocation7 [shape = 's32[1]{0}', space=sflag, size = 0x4, scoped, tag = 'scoped memory for tpu_custom_call.1']
    %14 = vsyncpa [#allocation3], 0
    %15 = vsyncpa [#allocation4], 0
    %16 = vsyncpa [#allocation7], 0
    // Predicated region
    $region2: #{tpu_custom_call.1} parent=1 // pred_check
      _
    $region3: #{tpu_custom_call.1} parent=1 // pred_check_branch
      %18 = sbr.rel (0) target = $region5
    $region4: #{tpu_custom_call.1} parent=1 // pred_region
      _
    $region5: #{tpu_custom_call.1} parent=1 // pred_fallthru
      _
    // Predicated region
    $region6: #{tpu_custom_call.1} parent=1 // pred_check
      _
    $region7: #{tpu_custom_call.1} parent=1 // pred_check_branch
      %20 = sbr.rel (0) target = $region9
    $region8: #{tpu_custom_call.1} parent=1 // pred_region
      %22 = vsyncadd [#allocation3], 0
      %s23 = sshll.u32 %s1, 4
      %s24 = int_to_ptr.hbm [resolvable:$true] %s23
      %s25 = sshll.u32 [#allocation2], 4
      %s26 = int_to_ptr.vmem [resolvable:$true] %s25
      %31 = dma.hbm_to_vmem [thread:$0]  %s24, 1792, %s26, [#allocation3], 256, 256, 16
    $region9: #{tpu_custom_call.1} parent=1 // pred_fallthru
      _
    // Predicated region
    $region10: #{tpu_custom_call.1} parent=1 // pred_check
      _
    $region11: #{tpu_custom_call.1} parent=1 // pred_check_branch
      %33 = sbr.rel (0) target = $region13
    $region12: #{tpu_custom_call.1} parent=1 // pred_region
      _
    $region13: #{tpu_custom_call.1} parent=1 // pred_fallthru
      _
    // Predicated region
    $region14: #{tpu_custom_call.1} parent=1 // pred_check
      _
    $region15: #{tpu_custom_call.1} parent=1 // pred_check_branch
      %35 = sbr.rel (0) target = $region17
    $region16: #{tpu_custom_call.1} parent=1 // pred_region
      _
    $region17: #{tpu_custom_call.1} parent=1 // pred_fallthru
      _
    // Predicated region
    $region18: #{tpu_custom_call.1} parent=1 // pred_check
      _
    $region19: #{tpu_custom_call.1} parent=1 // pred_check_branch
      %37 = sbr.rel (0) target = $region21
    $region20: #{tpu_custom_call.1} parent=1 // pred_region
      _
    $region21: #{tpu_custom_call.1} parent=1 // pred_fallthru
      _
    // Predicated region
    $region22: #{tpu_custom_call.1} parent=1 // pred_check
      _
    $region23: #{tpu_custom_call.1} parent=1 // pred_check_branch
      %39 = sbr.rel (0) target = $region25
    $region24: #{tpu_custom_call.1} parent=1 // pred_region
      _
    $region25: #{tpu_custom_call.1} parent=1 // pred_fallthru
      _
    // Predicated region
    $region26: #{tpu_custom_call.1} parent=1 // pred_check
      _
    $region27: #{tpu_custom_call.1} parent=1 // pred_check_branch
      %41 = sbr.rel (0) target = $region29
    $region28: #{tpu_custom_call.1} parent=1 // pred_region
      _
    $region29: #{tpu_custom_call.1} parent=1 // pred_fallthru
      _
    // Predicated region
    $region30: #{tpu_custom_call.1} parent=1 // pred_check
      _
    $region31: #{tpu_custom_call.1} parent=1 // pred_check_branch
      %43 = sbr.rel (0) target = $region33
    $region32: #{tpu_custom_call.1} parent=1 // pred_region
      %45 = dma.done [#allocation3], 1792
    $region33: #{tpu_custom_call.1} parent=1 // pred_fallthru
      _
    %v46 = vld [vmem:[%s0] sm:$0x3]
    %v47 = vld [vmem:[%s2] sm:$0xff]
    %v48 = vld [vmem:[%s2 + $0x8] sm:$0xff]
    %v49 = vld [vmem:[%s2 + $0x10] sm:$0xff]
    %v50 = vld [vmem:[%s2 + $0x18] sm:$0xff]
    %v51 = vld [vmem:[%s3] sm:$0x1]
    %v53 = vperm.slane %v51, 0
    %vm55 = vcmask 261120
    %v57 = vsel %vm55, %v46, 0
    %59 = vmatpush.msra.mxu0 0.0
    %60 = vmatpush.msra.mxu0 0.0
    %61 = vmatpush.msra.mxu0 0.0
    %62 = vmatpush.msra.mxu0 0.0
    %63 = vmatpush.msra.mxu0 0.0
    %64 = vmatpush.msra.mxu0 0.0
    %65 = vmatpush.msra.mxu0 0.0
    %66 = vmatpush.msra.mxu0 0.0
    %67 = vmatpush.msra.mxu0 0.0
    %68 = vmatpush.msra.mxu0 0.0
    %69 = vmatpush.msra.mxu0 0.0
    %70 = vmatpush.msra.mxu0 0.0
    %71 = vmatpush.msra.mxu0 %v50
    %72 = vmatpush.msra.mxu0 %v49
    %73 = vmatpush.msra.mxu0 %v48
    %74 = vmatpush.msra.mxu0 %v47
    %75 = vmatmul.f32.gmra.mxu0 %v57
    %v76 = vpop.f32.mrf.mxu0
    %v77 = vadd.f32 %v53, %v76
    %78 = vdwg.mxu0
    %v79 = vld [vmem:[#allocation2] sm:$0xff]
    %v80 = vld [vmem:[#allocation2 + $0x8] sm:$0xff]
    %v81 = vld [vmem:[#allocation2 + $0x10] sm:$0xff]
    %v82 = vld [vmem:[#allocation2 + $0x18] sm:$0xff]
    %v83 = vld [vmem:[#allocation2 + $0x20] sm:$0xff]
    %v84 = vld [vmem:[#allocation2 + $0x28] sm:$0xff]
    %v85 = vld [vmem:[#allocation2 + $0x30] sm:$0xff]
    %v86 = vld [vmem:[#allocation2 + $0x38] sm:$0xff]
    %v87 = vld [vmem:[#allocation2 + $0x40] sm:$0xff]
    %v88 = vld [vmem:[#allocation2 + $0x48] sm:$0xff]
    %v89 = vld [vmem:[#allocation2 + $0x50] sm:$0xff]
    %v90 = vld [vmem:[#allocation2 + $0x58] sm:$0xff]
    %v91 = vld [vmem:[#allocation2 + $0x60] sm:$0xff]
    %v92 = vld [vmem:[#allocation2 + $0x68] sm:$0xff]
    %v93 = vld [vmem:[%s4] sm:$0x1]
    %v94 = vld [vmem:[%s5] sm:$0xff]
    %v95 = vld [vmem:[%s5 + $0x8] sm:$0xff]
    %v96 = vld [vmem:[%s5 + $0x10] sm:$0xff]
    %v97 = vld [vmem:[%s5 + $0x18] sm:$0xff]
    %v98 = vld [vmem:[%s6] sm:$0x1]
    %v99 = vlaneseq
    %v100 = vand.u32 %v99, 127
    %vm101 = vcmp.eq.s32.totalorder %v100, 33
    %v102 = vsel %vm101, 1, 0
    %v103 = vcvt.s32.f32 %v102
    %vm104 = vcmask 457728
    %v106 = vsel %vm104, %v103, 0
    %108 = vmatpush.msra.mxu0 0.0
    %109 = vmatpush.msra.mxu0 0.0
    %110 = vmatpush.msra.mxu0 0.0
    %111 = vmatpush.msra.mxu0 0.0
    %112 = vmatpush.msra.mxu0 0.0
    %113 = vmatpush.msra.mxu0 0.0
    %114 = vmatpush.msra.mxu0 0.0
    %115 = vmatpush.msra.mxu0 0.0
    %116 = vmatpush.msra.mxu0 0.0
    %117 = vmatpush.msra.mxu0 %v91
    %118 = vmatpush.msra.mxu0 %v89
    %119 = vmatpush.msra.mxu0 %v87
    %120 = vmatpush.msra.mxu0 %v85
    %121 = vmatpush.msra.mxu0 %v83
    %122 = vmatpush.msra.mxu0 %v81
    %123 = vmatpush.msra.mxu0 %v79
    %124 = vmatmul.f32.gmra.mxu0 %v106
    %v125 = vpop.f32.mrf.mxu0
    %v126 = vadd.f32 0.0, %v125
    %127 = vdwg.mxu0
    %128 = vmatpush.msra.mxu0 0.0
    %129 = vmatpush.msra.mxu0 0.0
    %130 = vmatpush.msra.mxu0 0.0
    %131 = vmatpush.msra.mxu0 0.0
    %132 = vmatpush.msra.mxu0 0.0
    %133 = vmatpush.msra.mxu0 0.0
    %134 = vmatpush.msra.mxu0 0.0
    %135 = vmatpush.msra.mxu0 0.0
    %136 = vmatpush.msra.mxu0 0.0
    %137 = vmatpush.msra.mxu0 %v92
    %138 = vmatpush.msra.mxu0 %v90
    %139 = vmatpush.msra.mxu0 %v88
    %140 = vmatpush.msra.mxu0 %v86
    %141 = vmatpush.msra.mxu0 %v84
    %142 = vmatpush.msra.mxu0 %v82
    %143 = vmatpush.msra.mxu0 %v80
    %144 = vmatmul.f32.gmra.mxu0 %v106
    %v145 = vpop.f32.mrf.mxu0
    %v146 = vadd.f32 0.0, %v145
    %147 = vdwg.mxu0
    %v148 = vadd.f32 %v126, %v77
    %v150 = vperm.slane %v93, 0
    %151 = vrot.lane.b32.xlu0 %v150, 96
    %v152 = vpop.permute.xlu0 %151
    %v154 = vadd.f32 %v126, %v152
    %v155 = vadd.f32 %v146, %v152
    %157 = vrot.lane.b32.xlu0 %v154, 32
    %v158 = vpop.permute.xlu0 %157
    %v160 = vadd.f32 %v148, %v158
    %v161 = vxor.u32 %v160, 2147483648
    %v162 = vmul.f32 %v161, 1.442695
    %v163 = vpow.pop %v162
    %v164 = vadd.f32 %v163, 1.0
    %v165 = vrcp.pop %v164
    %v166 = vmul.f32 %v164, %v165
    %v167 = vsub.f32 1.0, %v166
    %v168 = vmul.f32 %v165, %v167
    %v169 = vadd.f32 %v165, %v168
    %vm170 = vweird.f32 %v164
    %vm171 = vweird.f32 %v165
    %vm172 = vmor %vm170, %vm171
    %v173 = vsel %vm172, %v165, %v169
    %v174 = vand.u32 2147483647, %v164
    %vm175 = vcmp.eq.f32.partialorder %v174, 8.507059e+37
    %v176 = vand.u32 %v164, 2147483648
    %v177 = vor.u32 1.1754944e-38, %v176
    %v178 = vsel %vm175, %v177, %v173
    %v179 = vmul.f32 1.0, %v178
    %181 = vrot.lane.b32.xlu0 %v155, 32
    %v182 = vpop.permute.xlu0 %181
    %v184 = vadd.f32 %v148, %v182
    %v185 = vxor.u32 %v184, 2147483648
    %v186 = vmul.f32 %v185, 1.442695
    %v187 = vpow.pop %v186
    %v188 = vadd.f32 %v187, 1.0
    %v189 = vrcp.pop %v188
    %v190 = vmul.f32 %v188, %v189
    %v191 = vsub.f32 1.0, %v190
    %v192 = vmul.f32 %v189, %v191
    %v193 = vadd.f32 %v189, %v192
    %vm194 = vweird.f32 %v188
    %vm195 = vweird.f32 %v189
    %vm196 = vmor %vm194, %vm195
    %v197 = vsel %vm196, %v189, %v193
    %v198 = vand.u32 2147483647, %v188
    %vm199 = vcmp.eq.f32.partialorder %v198, 8.507059e+37
    %v200 = vand.u32 %v188, 2147483648
    %v201 = vor.u32 1.1754944e-38, %v200
    %v202 = vsel %vm199, %v201, %v197
    %v203 = vmul.f32 1.0, %v202
    %204 = vrot.lane.b32.xlu0 %v155, 96
    %v205 = vpop.permute.xlu0 %204
    %v207 = vmul.f32 %v179, %v205
    %209 = vrot.lane.b32.xlu0 %v207, 64
    %v210 = vpop.permute.xlu0 %209
    %v212 = vadd.f32 %v148, %v210
    %v213 = vtanh.pop %v212
    %v214 = vsub.f32 1.0, %v203
    %216 = vrot.lane.b32.xlu0 %v213, 96
    %v217 = vpop.permute.xlu0 %216
    %v219 = vmul.f32 %v214, %v217
    %v220 = vmul.f32 %v203, 0.0
    %v221 = vadd.f32 %v219, %v220
    %v223 = vperm.slane %v98, 0
    %226 = vrot.lane.b32.xlu0 %v221, 96
    %v227 = vpop.permute.xlu0 %226
    %v228 = vsel %vm55, %v227, 0
    %230 = vmatpush.msra.mxu0 0.0
    %231 = vmatpush.msra.mxu0 0.0
    %232 = vmatpush.msra.mxu0 0.0
    %233 = vmatpush.msra.mxu0 0.0
    %234 = vmatpush.msra.mxu0 0.0
    %235 = vmatpush.msra.mxu0 0.0
    %236 = vmatpush.msra.mxu0 0.0
    %237 = vmatpush.msra.mxu0 0.0
    %238 = vmatpush.msra.mxu0 0.0
    %239 = vmatpush.msra.mxu0 0.0
    %240 = vmatpush.msra.mxu0 0.0
    %241 = vmatpush.msra.mxu0 0.0
    %242 = vmatpush.msra.mxu0 %v97
    %243 = vmatpush.msra.mxu0 %v96
    %244 = vmatpush.msra.mxu0 %v95
    %245 = vmatpush.msra.mxu0 %v94
    %246 = vmatmul.f32.gmra.mxu0 %v228
    %v247 = vpop.f32.mrf.mxu0
    %v248 = vadd.f32 %v223, %v247
    %249 = vdwg.mxu0
    %vm250 = vcmask 189440
    %251 = vst.msk [vmem:[#allocation6] sm:$0x3] %vm250, %v248
    %v252 = vsel %vm250, %v248, -inf
    %253 = vmax.xlane.f32.xlu0 %v252
    %v254 = vpop.xlane.xlu0 %253
    %vm255 = vcmp.eq.f32.partialorder %v248, %v254
    %v256 = vsel %vm255, %v100, 24
    %v257 = vsel %vm250, %v256, 2147483647
    %v258 = vand.u32 %v257, 65535
    %v259 = vshra.s32 %v257, 16
    %v260 = vcvt.s32.f32 %v258
    %v261 = vcvt.s32.f32 %v259
    %262 = vmin.xlane.f32.xlu0 %v261
    %v263 = vpop.xlane.xlu0 %262
    %vm264 = vcmp.eq.f32.partialorder %v261, %v263
    %v265 = vsel %vm264, %v260, inf
    %266 = vmin.xlane.f32.xlu0 %v265
    %v267 = vpop.xlane.xlu0 %266
    %v268 = vcvt.f32.s32 %v267
    %v269 = vcvt.f32.s32 %v263
    %v270 = vshll.u32 %v269, 16
    %v271 = vadd.s32 %v270, %v268
    %vm272 = vcmp.eq.s32.totalorder %v100, 0
    %v273 = vsel %vm272, %v271, 0
    %vm274 = vcmp.eq.s32.totalorder %v100, %v271
    %v275 = vsel %vm274, 1, 0
    %v276 = vcvt.s32.f32 %v275
    %279 = vrot.lane.b32.xlu0 %v276, 32
    %v280 = vpop.permute.xlu0 %279
    %v282 = vsel %vm55, %v227, %v280
    %v284 = vsel %vm104, %v282, 0
    %286 = vmatpush.msra.mxu0 0.0
    %287 = vmatpush.msra.mxu0 0.0
    %288 = vmatpush.msra.mxu0 0.0
    %289 = vmatpush.msra.mxu0 0.0
    %290 = vmatpush.msra.mxu0 0.0
    %291 = vmatpush.msra.mxu0 0.0
    %292 = vmatpush.msra.mxu0 0.0
    %293 = vmatpush.msra.mxu0 0.0
    %294 = vmatpush.msra.mxu0 0.0
    %295 = vmatpush.msra.mxu0 %v91
    %296 = vmatpush.msra.mxu0 %v89
    %297 = vmatpush.msra.mxu0 %v87
    %298 = vmatpush.msra.mxu0 %v85
    %299 = vmatpush.msra.mxu0 %v83
    %300 = vmatpush.msra.mxu0 %v81
    %301 = vmatpush.msra.mxu0 %v79
    %302 = vmatmul.f32.gmra.mxu0 %v284
    %v303 = vpop.f32.mrf.mxu0
    %v304 = vadd.f32 0.0, %v303
    %305 = vdwg.mxu0
    %306 = vmatpush.msra.mxu0 0.0
    %307 = vmatpush.msra.mxu0 0.0
    %308 = vmatpush.msra.mxu0 0.0
    %309 = vmatpush.msra.mxu0 0.0
    %310 = vmatpush.msra.mxu0 0.0
    %311 = vmatpush.msra.mxu0 0.0
    %312 = vmatpush.msra.mxu0 0.0
    %313 = vmatpush.msra.mxu0 0.0
    %314 = vmatpush.msra.mxu0 0.0
    %315 = vmatpush.msra.mxu0 %v92
    %316 = vmatpush.msra.mxu0 %v90
    %317 = vmatpush.msra.mxu0 %v88
    %318 = vmatpush.msra.mxu0 %v86
    %319 = vmatpush.msra.mxu0 %v84
    %320 = vmatpush.msra.mxu0 %v82
    %321 = vmatpush.msra.mxu0 %v80
    %322 = vmatmul.f32.gmra.mxu0 %v284
    %v323 = vpop.f32.mrf.mxu0
    %v324 = vadd.f32 0.0, %v323
    %325 = vdwg.mxu0
    %v326 = vadd.f32 %v304, %v77
    %v327 = vadd.f32 %v304, %v152
    %v328 = vadd.f32 %v324, %v152
    %330 = vrot.lane.b32.xlu0 %v327, 32
    %v331 = vpop.permute.xlu0 %330
    %v333 = vadd.f32 %v326, %v331
    %v334 = vxor.u32 %v333, 2147483648
    %v335 = vmul.f32 %v334, 1.442695
    %v336 = vpow.pop %v335
    %v337 = vadd.f32 %v336, 1.0
    %v338 = vrcp.pop %v337
    %v339 = vmul.f32 %v337, %v338
    %v340 = vsub.f32 1.0, %v339
    %v341 = vmul.f32 %v338, %v340
    %v342 = vadd.f32 %v338, %v341
    %vm343 = vweird.f32 %v337
    %vm344 = vweird.f32 %v338
    %vm345 = vmor %vm343, %vm344
    %v346 = vsel %vm345, %v338, %v342
    %v347 = vand.u32 2147483647, %v337
    %vm348 = vcmp.eq.f32.partialorder %v347, 8.507059e+37
    %v349 = vand.u32 %v337, 2147483648
    %v350 = vor.u32 1.1754944e-38, %v349
    %v351 = vsel %vm348, %v350, %v346
    %v352 = vmul.f32 1.0, %v351
    %354 = vrot.lane.b32.xlu0 %v328, 32
    %v355 = vpop.permute.xlu0 %354
    %v357 = vadd.f32 %v326, %v355
    %v358 = vxor.u32 %v357, 2147483648
    %v359 = vmul.f32 %v358, 1.442695
    %v360 = vpow.pop %v359
    %v361 = vadd.f32 %v360, 1.0
    %v362 = vrcp.pop %v361
    %v363 = vmul.f32 %v361, %v362
    %v364 = vsub.f32 1.0, %v363
    %v365 = vmul.f32 %v362, %v364
    %v366 = vadd.f32 %v362, %v365
    %vm367 = vweird.f32 %v361
    %vm368 = vweird.f32 %v362
    %vm369 = vmor %vm367, %vm368
    %v370 = vsel %vm369, %v362, %v366
    %v371 = vand.u32 2147483647, %v361
    %vm372 = vcmp.eq.f32.partialorder %v371, 8.507059e+37
    %v373 = vand.u32 %v361, 2147483648
    %v374 = vor.u32 1.1754944e-38, %v373
    %v375 = vsel %vm372, %v374, %v370
    %v376 = vmul.f32 1.0, %v375
    %377 = vrot.lane.b32.xlu0 %v328, 96
    %v378 = vpop.permute.xlu0 %377
    %v380 = vmul.f32 %v352, %v378
    %382 = vrot.lane.b32.xlu0 %v380, 64
    %v383 = vpop.permute.xlu0 %382
    %v385 = vadd.f32 %v326, %v383
    %v386 = vtanh.pop %v385
    %v387 = vsub.f32 1.0, %v376
    %389 = vrot.lane.b32.xlu0 %v386, 96
    %v390 = vpop.permute.xlu0 %389
    %v392 = vmul.f32 %v387, %v390
    %v393 = vmul.f32 %v376, %v221
    %v394 = vadd.f32 %v392, %v393
    %396 = vrot.lane.b32.xlu0 %v394, 96
    %v397 = vpop.permute.xlu0 %396
    %v398 = vsel %vm55, %v397, 0
    %400 = vmatpush.msra.mxu0 0.0
    %401 = vmatpush.msra.mxu0 0.0
    %402 = vmatpush.msra.mxu0 0.0
    %403 = vmatpush.msra.mxu0 0.0
    %404 = vmatpush.msra.mxu0 0.0
    %405 = vmatpush.msra.mxu0 0.0
    %406 = vmatpush.msra.mxu0 0.0
    %407 = vmatpush.msra.mxu0 0.0
    %408 = vmatpush.msra.mxu0 0.0
    %409 = vmatpush.msra.mxu0 0.0
    %410 = vmatpush.msra.mxu0 0.0
    %411 = vmatpush.msra.mxu0 0.0
    %412 = vmatpush.msra.mxu0 %v97
    %413 = vmatpush.msra.mxu0 %v96
    %414 = vmatpush.msra.mxu0 %v95
    %415 = vmatpush.msra.mxu0 %v94
    %416 = vmatmul.f32.gmra.mxu0 %v398
    %v417 = vpop.f32.mrf.mxu0
    %v418 = vadd.f32 %v223, %v417
    %419 = vdwg.mxu0
    %s420 = scalar_lea.vmem [#allocation6], 2
    %421 = vst.msk [vmem:[%s420] sm:$0x3] %vm250, %v418
    %v422 = vsel %vm250, %v418, -inf
    %423 = vmax.xlane.f32.xlu0 %v422
    %v424 = vpop.xlane.xlu0 %423
    %vm425 = vcmp.eq.f32.partialorder %v418, %v424
    %v426 = vsel %vm425, %v100, 24
    %v427 = vsel %vm250, %v426, 2147483647
    %v428 = vand.u32 %v427, 65535
    %v429 = vshra.s32 %v427, 16
    %v430 = vcvt.s32.f32 %v428
    %v431 = vcvt.s32.f32 %v429
    %432 = vmin.xlane.f32.xlu0 %v431
    %v433 = vpop.xlane.xlu0 %432
    %vm434 = vcmp.eq.f32.partialorder %v431, %v433
    %v435 = vsel %vm434, %v430, inf
    %436 = vmin.xlane.f32.xlu0 %v435
    %v437 = vpop.xlane.xlu0 %436
    %v438 = vcvt.f32.s32 %v437
    %v439 = vcvt.f32.s32 %v433
    %v440 = vshll.u32 %v439, 16
    %v441 = vadd.s32 %v440, %v438
    %vm442 = vcmp.eq.s32.totalorder %v100, 1
    %v443 = vsel %vm442, %v441, %v273
    %vm444 = vcmp.eq.s32.totalorder %v100, %v441
    %v445 = vsel %vm444, 1, 0
    %v446 = vcvt.s32.f32 %v445
    %449 = vrot.lane.b32.xlu0 %v446, 32
    %v450 = vpop.permute.xlu0 %449
    %v452 = vsel %vm55, %v397, %v450
    %v454 = vsel %vm104, %v452, 0
    %456 = vmatpush.msra.mxu0 0.0
    %457 = vmatpush.msra.mxu0 0.0
    %458 = vmatpush.msra.mxu0 0.0
    %459 = vmatpush.msra.mxu0 0.0
    %460 = vmatpush.msra.mxu0 0.0
    %461 = vmatpush.msra.mxu0 0.0
    %462 = vmatpush.msra.mxu0 0.0
    %463 = vmatpush.msra.mxu0 0.0
    %464 = vmatpush.msra.mxu0 0.0
    %465 = vmatpush.msra.mxu0 %v91
    %466 = vmatpush.msra.mxu0 %v89
    %467 = vmatpush.msra.mxu0 %v87
    %468 = vmatpush.msra.mxu0 %v85
    %469 = vmatpush.msra.mxu0 %v83
    %470 = vmatpush.msra.mxu0 %v81
    %471 = vmatpush.msra.mxu0 %v79
    %472 = vmatmul.f32.gmra.mxu0 %v454
    %v473 = vpop.f32.mrf.mxu0
    %v474 = vadd.f32 0.0, %v473
    %475 = vdwg.mxu0
    %476 = vmatpush.msra.mxu0 0.0
    %477 = vmatpush.msra.mxu0 0.0
    %478 = vmatpush.msra.mxu0 0.0
    %479 = vmatpush.msra.mxu0 0.0
    %480 = vmatpush.msra.mxu0 0.0
    %481 = vmatpush.msra.mxu0 0.0
    %482 = vmatpush.msra.mxu0 0.0
    %483 = vmatpush.msra.mxu0 0.0
    %484 = vmatpush.msra.mxu0 0.0
    %485 = vmatpush.msra.mxu0 %v92
    %486 = vmatpush.msra.mxu0 %v90
    %487 = vmatpush.msra.mxu0 %v88
    %488 = vmatpush.msra.mxu0 %v86
    %489 = vmatpush.msra.mxu0 %v84
    %490 = vmatpush.msra.mxu0 %v82
    %491 = vmatpush.msra.mxu0 %v80
    %492 = vmatmul.f32.gmra.mxu0 %v454
    %v493 = vpop.f32.mrf.mxu0
    %v494 = vadd.f32 0.0, %v493
    %495 = vdwg.mxu0
    %v496 = vadd.f32 %v474, %v77
    %v497 = vadd.f32 %v474, %v152
    %v498 = vadd.f32 %v494, %v152
    %500 = vrot.lane.b32.xlu0 %v497, 32
    %v501 = vpop.permute.xlu0 %500
    %v503 = vadd.f32 %v496, %v501
    %v504 = vxor.u32 %v503, 2147483648
    %v505 = vmul.f32 %v504, 1.442695
    %v506 = vpow.pop %v505
    %v507 = vadd.f32 %v506, 1.0
    %v508 = vrcp.pop %v507
    %v509 = vmul.f32 %v507, %v508
    %v510 = vsub.f32 1.0, %v509
    %v511 = vmul.f32 %v508, %v510
    %v512 = vadd.f32 %v508, %v511
    %vm513 = vweird.f32 %v507
    %vm514 = vweird.f32 %v508
    %vm515 = vmor %vm513, %vm514
    %v516 = vsel %vm515, %v508, %v512
    %v517 = vand.u32 2147483647, %v507
    %vm518 = vcmp.eq.f32.partialorder %v517, 8.507059e+37
    %v519 = vand.u32 %v507, 2147483648
    %v520 = vor.u32 1.1754944e-38, %v519
    %v521 = vsel %vm518, %v520, %v516
    %v522 = vmul.f32 1.0, %v521
    %524 = vrot.lane.b32.xlu0 %v498, 32
    %v525 = vpop.permute.xlu0 %524
    %v527 = vadd.f32 %v496, %v525
    %v528 = vxor.u32 %v527, 2147483648
    %v529 = vmul.f32 %v528, 1.442695
    %v530 = vpow.pop %v529
    %v531 = vadd.f32 %v530, 1.0
    %v532 = vrcp.pop %v531
    %v533 = vmul.f32 %v531, %v532
    %v534 = vsub.f32 1.0, %v533
    %v535 = vmul.f32 %v532, %v534
    %v536 = vadd.f32 %v532, %v535
    %vm537 = vweird.f32 %v531
    %vm538 = vweird.f32 %v532
    %vm539 = vmor %vm537, %vm538
    %v540 = vsel %vm539, %v532, %v536
    %v541 = vand.u32 2147483647, %v531
    %vm542 = vcmp.eq.f32.partialorder %v541, 8.507059e+37
    %v543 = vand.u32 %v531, 2147483648
    %v544 = vor.u32 1.1754944e-38, %v543
    %v545 = vsel %vm542, %v544, %v540
    %v546 = vmul.f32 1.0, %v545
    %547 = vrot.lane.b32.xlu0 %v498, 96
    %v548 = vpop.permute.xlu0 %547
    %v550 = vmul.f32 %v522, %v548
    %552 = vrot.lane.b32.xlu0 %v550, 64
    %v553 = vpop.permute.xlu0 %552
    %v555 = vadd.f32 %v496, %v553
    %v556 = vtanh.pop %v555
    %v557 = vsub.f32 1.0, %v546
    %559 = vrot.lane.b32.xlu0 %v556, 96
    %v560 = vpop.permute.xlu0 %559
    %v562 = vmul.f32 %v557, %v560
    %v563 = vmul.f32 %v546, %v394
    %v564 = vadd.f32 %v562, %v563
    %566 = vrot.lane.b32.xlu0 %v564, 96
    %v567 = vpop.permute.xlu0 %566
    %v568 = vsel %vm55, %v567, 0
    %570 = vmatpush.msra.mxu0 0.0
    %571 = vmatpush.msra.mxu0 0.0
    %572 = vmatpush.msra.mxu0 0.0
    %573 = vmatpush.msra.mxu0 0.0
    %574 = vmatpush.msra.mxu0 0.0
    %575 = vmatpush.msra.mxu0 0.0
    %576 = vmatpush.msra.mxu0 0.0
    %577 = vmatpush.msra.mxu0 0.0
    %578 = vmatpush.msra.mxu0 0.0
    %579 = vmatpush.msra.mxu0 0.0
    %580 = vmatpush.msra.mxu0 0.0
    %581 = vmatpush.msra.mxu0 0.0
    %582 = vmatpush.msra.mxu0 %v97
    %583 = vmatpush.msra.mxu0 %v96
    %584 = vmatpush.msra.mxu0 %v95
    %585 = vmatpush.msra.mxu0 %v94
    %586 = vmatmul.f32.gmra.mxu0 %v568
    %v587 = vpop.f32.mrf.mxu0
    %v588 = vadd.f32 %v223, %v587
    %589 = vdwg.mxu0
    %s590 = scalar_lea.vmem [#allocation6], 4
    %591 = vst.msk [vmem:[%s590] sm:$0x3] %vm250, %v588
    %v592 = vsel %vm250, %v588, -inf
    %593 = vmax.xlane.f32.xlu0 %v592
    %v594 = vpop.xlane.xlu0 %593
    %vm595 = vcmp.eq.f32.partialorder %v588, %v594
    %v596 = vsel %vm595, %v100, 24
    %v597 = vsel %vm250, %v596, 2147483647
    %v598 = vand.u32 %v597, 65535
    %v599 = vshra.s32 %v597, 16
    %v600 = vcvt.s32.f32 %v598
    %v601 = vcvt.s32.f32 %v599
    %602 = vmin.xlane.f32.xlu0 %v601
    %v603 = vpop.xlane.xlu0 %602
    %vm604 = vcmp.eq.f32.partialorder %v601, %v603
    %v605 = vsel %vm604, %v600, inf
    %606 = vmin.xlane.f32.xlu0 %v605
    %v607 = vpop.xlane.xlu0 %606
    %v608 = vcvt.f32.s32 %v607
    %v609 = vcvt.f32.s32 %v603
    %v610 = vshll.u32 %v609, 16
    %v611 = vadd.s32 %v610, %v608
    %vm612 = vcmp.eq.s32.totalorder %v100, 2
    %v613 = vsel %vm612, %v611, %v443
    %vm614 = vcmp.eq.s32.totalorder %v100, %v611
    %v615 = vsel %vm614, 1, 0
    %v616 = vcvt.s32.f32 %v615
    %619 = vrot.lane.b32.xlu0 %v616, 32
    %v620 = vpop.permute.xlu0 %619
    %v622 = vsel %vm55, %v567, %v620
    %v624 = vsel %vm104, %v622, 0
    %626 = vmatpush.msra.mxu0 0.0
    %627 = vmatpush.msra.mxu0 0.0
    %628 = vmatpush.msra.mxu0 0.0
    %629 = vmatpush.msra.mxu0 0.0
    %630 = vmatpush.msra.mxu0 0.0
    %631 = vmatpush.msra.mxu0 0.0
    %632 = vmatpush.msra.mxu0 0.0
    %633 = vmatpush.msra.mxu0 0.0
    %634 = vmatpush.msra.mxu0 0.0
    %635 = vmatpush.msra.mxu0 %v91
    %636 = vmatpush.msra.mxu0 %v89
    %637 = vmatpush.msra.mxu0 %v87
    %638 = vmatpush.msra.mxu0 %v85
    %639 = vmatpush.msra.mxu0 %v83
    %640 = vmatpush.msra.mxu0 %v81
    %641 = vmatpush.msra.mxu0 %v79
    %642 = vmatmul.f32.gmra.mxu0 %v624
    %v643 = vpop.f32.mrf.mxu0
    %v644 = vadd.f32 0.0, %v643
    %645 = vdwg.mxu0
    %646 = vmatpush.msra.mxu0 0.0
    %647 = vmatpush.msra.mxu0 0.0
    %648 = vmatpush.msra.mxu0 0.0
    %649 = vmatpush.msra.mxu0 0.0
    %650 = vmatpush.msra.mxu0 0.0
    %651 = vmatpush.msra.mxu0 0.0
    %652 = vmatpush.msra.mxu0 0.0
    %653 = vmatpush.msra.mxu0 0.0
    %654 = vmatpush.msra.mxu0 0.0
    %655 = vmatpush.msra.mxu0 %v92
    %656 = vmatpush.msra.mxu0 %v90
    %657 = vmatpush.msra.mxu0 %v88
    %658 = vmatpush.msra.mxu0 %v86
    %659 = vmatpush.msra.mxu0 %v84
    %660 = vmatpush.msra.mxu0 %v82
    %661 = vmatpush.msra.mxu0 %v80
    %662 = vmatmul.f32.gmra.mxu0 %v624
    %v663 = vpop.f32.mrf.mxu0
    %v664 = vadd.f32 0.0, %v663
    %665 = vdwg.mxu0
    %v666 = vadd.f32 %v644, %v77
    %v667 = vadd.f32 %v644, %v152
    %v668 = vadd.f32 %v664, %v152
    %670 = vrot.lane.b32.xlu0 %v667, 32
    %v671 = vpop.permute.xlu0 %670
    %v673 = vadd.f32 %v666, %v671
    %v674 = vxor.u32 %v673, 2147483648
    %v675 = vmul.f32 %v674, 1.442695
    %v676 = vpow.pop %v675
    %v677 = vadd.f32 %v676, 1.0
    %v678 = vrcp.pop %v677
    %v679 = vmul.f32 %v677, %v678
    %v680 = vsub.f32 1.0, %v679
    %v681 = vmul.f32 %v678, %v680
    %v682 = vadd.f32 %v678, %v681
    %vm683 = vweird.f32 %v677
    %vm684 = vweird.f32 %v678
    %vm685 = vmor %vm683, %vm684
    %v686 = vsel %vm685, %v678, %v682
    %v687 = vand.u32 2147483647, %v677
    %vm688 = vcmp.eq.f32.partialorder %v687, 8.507059e+37
    %v689 = vand.u32 %v677, 2147483648
    %v690 = vor.u32 1.1754944e-38, %v689
    %v691 = vsel %vm688, %v690, %v686
    %v692 = vmul.f32 1.0, %v691
    %694 = vrot.lane.b32.xlu0 %v668, 32
    %v695 = vpop.permute.xlu0 %694
    %v697 = vadd.f32 %v666, %v695
    %v698 = vxor.u32 %v697, 2147483648
    %v699 = vmul.f32 %v698, 1.442695
    %v700 = vpow.pop %v699
    %v701 = vadd.f32 %v700, 1.0
    %v702 = vrcp.pop %v701
    %v703 = vmul.f32 %v701, %v702
    %v704 = vsub.f32 1.0, %v703
    %v705 = vmul.f32 %v702, %v704
    %v706 = vadd.f32 %v702, %v705
    %vm707 = vweird.f32 %v701
    %vm708 = vweird.f32 %v702
    %vm709 = vmor %vm707, %vm708
    %v710 = vsel %vm709, %v702, %v706
    %v711 = vand.u32 2147483647, %v701
    %vm712 = vcmp.eq.f32.partialorder %v711, 8.507059e+37
    %v713 = vand.u32 %v701, 2147483648
    %v714 = vor.u32 1.1754944e-38, %v713
    %v715 = vsel %vm712, %v714, %v710
    %v716 = vmul.f32 1.0, %v715
    %717 = vrot.lane.b32.xlu0 %v668, 96
    %v718 = vpop.permute.xlu0 %717
    %v720 = vmul.f32 %v692, %v718
    %722 = vrot.lane.b32.xlu0 %v720, 64
    %v723 = vpop.permute.xlu0 %722
    %v725 = vadd.f32 %v666, %v723
    %v726 = vtanh.pop %v725
    %v727 = vsub.f32 1.0, %v716
    %729 = vrot.lane.b32.xlu0 %v726, 96
    %v730 = vpop.permute.xlu0 %729
    %v732 = vmul.f32 %v727, %v730
    %v733 = vmul.f32 %v716, %v564
    %v734 = vadd.f32 %v732, %v733
    %736 = vrot.lane.b32.xlu0 %v734, 96
    %v737 = vpop.permute.xlu0 %736
    %v738 = vsel %vm55, %v737, 0
    %740 = vmatpush.msra.mxu0 0.0
    %741 = vmatpush.msra.mxu0 0.0
    %742 = vmatpush.msra.mxu0 0.0
    %743 = vmatpush.msra.mxu0 0.0
    %744 = vmatpush.msra.mxu0 0.0
    %745 = vmatpush.msra.mxu0 0.0
    %746 = vmatpush.msra.mxu0 0.0
    %747 = vmatpush.msra.mxu0 0.0
    %748 = vmatpush.msra.mxu0 0.0
    %749 = vmatpush.msra.mxu0 0.0
    %750 = vmatpush.msra.mxu0 0.0
    %751 = vmatpush.msra.mxu0 0.0
    %752 = vmatpush.msra.mxu0 %v97
    %753 = vmatpush.msra.mxu0 %v96
    %754 = vmatpush.msra.mxu0 %v95
    %755 = vmatpush.msra.mxu0 %v94
    %756 = vmatmul.f32.gmra.mxu0 %v738
    %v757 = vpop.f32.mrf.mxu0
    %v758 = vadd.f32 %v223, %v757
    %759 = vdwg.mxu0
    %s760 = scalar_lea.vmem [#allocation6], 6
    %761 = vst.msk [vmem:[%s760] sm:$0x3] %vm250, %v758
    %v762 = vsel %vm250, %v758, -inf
    %763 = vmax.xlane.f32.xlu0 %v762
    %v764 = vpop.xlane.xlu0 %763
    %vm765 = vcmp.eq.f32.partialorder %v758, %v764
    %v766 = vsel %vm765, %v100, 24
    %v767 = vsel %vm250, %v766, 2147483647
    %v768 = vand.u32 %v767, 65535
    %v769 = vshra.s32 %v767, 16
    %v770 = vcvt.s32.f32 %v768
    %v771 = vcvt.s32.f32 %v769
    %772 = vmin.xlane.f32.xlu0 %v771
    %v773 = vpop.xlane.xlu0 %772
    %vm774 = vcmp.eq.f32.partialorder %v771, %v773
    %v775 = vsel %vm774, %v770, inf
    %776 = vmin.xlane.f32.xlu0 %v775
    %v777 = vpop.xlane.xlu0 %776
    %v778 = vcvt.f32.s32 %v777
    %v779 = vcvt.f32.s32 %v773
    %v780 = vshll.u32 %v779, 16
    %v781 = vadd.s32 %v780, %v778
    %vm782 = vcmp.eq.s32.totalorder %v100, 3
    %v783 = vsel %vm782, %v781, %v613
    %vm784 = vcmp.eq.s32.totalorder %v100, %v781
    %v785 = vsel %vm784, 1, 0
    %v786 = vcvt.s32.f32 %v785
    %789 = vrot.lane.b32.xlu0 %v786, 32
    %v790 = vpop.permute.xlu0 %789
    %v792 = vsel %vm55, %v737, %v790
    %v794 = vsel %vm104, %v792, 0
    %796 = vmatpush.msra.mxu0 0.0
    %797 = vmatpush.msra.mxu0 0.0
    %798 = vmatpush.msra.mxu0 0.0
    %799 = vmatpush.msra.mxu0 0.0
    %800 = vmatpush.msra.mxu0 0.0
    %801 = vmatpush.msra.mxu0 0.0
    %802 = vmatpush.msra.mxu0 0.0
    %803 = vmatpush.msra.mxu0 0.0
    %804 = vmatpush.msra.mxu0 0.0
    %805 = vmatpush.msra.mxu0 %v91
    %806 = vmatpush.msra.mxu0 %v89
    %807 = vmatpush.msra.mxu0 %v87
    %808 = vmatpush.msra.mxu0 %v85
    %809 = vmatpush.msra.mxu0 %v83
    %810 = vmatpush.msra.mxu0 %v81
    %811 = vmatpush.msra.mxu0 %v79
    %812 = vmatmul.f32.gmra.mxu0 %v794
    %v813 = vpop.f32.mrf.mxu0
    %v814 = vadd.f32 0.0, %v813
    %815 = vdwg.mxu0
    %816 = vmatpush.msra.mxu0 0.0
    %817 = vmatpush.msra.mxu0 0.0
    %818 = vmatpush.msra.mxu0 0.0
    %819 = vmatpush.msra.mxu0 0.0
    %820 = vmatpush.msra.mxu0 0.0
    %821 = vmatpush.msra.mxu0 0.0
    %822 = vmatpush.msra.mxu0 0.0
    %823 = vmatpush.msra.mxu0 0.0
    %824 = vmatpush.msra.mxu0 0.0
    %825 = vmatpush.msra.mxu0 %v92
    %826 = vmatpush.msra.mxu0 %v90
    %827 = vmatpush.msra.mxu0 %v88
    %828 = vmatpush.msra.mxu0 %v86
    %829 = vmatpush.msra.mxu0 %v84
    %830 = vmatpush.msra.mxu0 %v82
    %831 = vmatpush.msra.mxu0 %v80
    %832 = vmatmul.f32.gmra.mxu0 %v794
    %v833 = vpop.f32.mrf.mxu0
    %v834 = vadd.f32 0.0, %v833
    %835 = vdwg.mxu0
    %v836 = vadd.f32 %v814, %v77
    %v837 = vadd.f32 %v814, %v152
    %v838 = vadd.f32 %v834, %v152
    %840 = vrot.lane.b32.xlu0 %v837, 32
    %v841 = vpop.permute.xlu0 %840
    %v843 = vadd.f32 %v836, %v841
    %v844 = vxor.u32 %v843, 2147483648
    %v845 = vmul.f32 %v844, 1.442695
    %v846 = vpow.pop %v845
    %v847 = vadd.f32 %v846, 1.0
    %v848 = vrcp.pop %v847
    %v849 = vmul.f32 %v847, %v848
    %v850 = vsub.f32 1.0, %v849
    %v851 = vmul.f32 %v848, %v850
    %v852 = vadd.f32 %v848, %v851
    %vm853 = vweird.f32 %v847
    %vm854 = vweird.f32 %v848
    %vm855 = vmor %vm853, %vm854
    %v856 = vsel %vm855, %v848, %v852
    %v857 = vand.u32 2147483647, %v847
    %vm858 = vcmp.eq.f32.partialorder %v857, 8.507059e+37
    %v859 = vand.u32 %v847, 2147483648
    %v860 = vor.u32 1.1754944e-38, %v859
    %v861 = vsel %vm858, %v860, %v856
    %v862 = vmul.f32 1.0, %v861
    %864 = vrot.lane.b32.xlu0 %v838, 32
    %v865 = vpop.permute.xlu0 %864
    %v867 = vadd.f32 %v836, %v865
    %v868 = vxor.u32 %v867, 2147483648
    %v869 = vmul.f32 %v868, 1.442695
    %v870 = vpow.pop %v869
    %v871 = vadd.f32 %v870, 1.0
    %v872 = vrcp.pop %v871
    %v873 = vmul.f32 %v871, %v872
    %v874 = vsub.f32 1.0, %v873
    %v875 = vmul.f32 %v872, %v874
    %v876 = vadd.f32 %v872, %v875
    %vm877 = vweird.f32 %v871
    %vm878 = vweird.f32 %v872
    %vm879 = vmor %vm877, %vm878
    %v880 = vsel %vm879, %v872, %v876
    %v881 = vand.u32 2147483647, %v871
    %vm882 = vcmp.eq.f32.partialorder %v881, 8.507059e+37
    %v883 = vand.u32 %v871, 2147483648
    %v884 = vor.u32 1.1754944e-38, %v883
    %v885 = vsel %vm882, %v884, %v880
    %v886 = vmul.f32 1.0, %v885
    %887 = vrot.lane.b32.xlu0 %v838, 96
    %v888 = vpop.permute.xlu0 %887
    %v890 = vmul.f32 %v862, %v888
    %892 = vrot.lane.b32.xlu0 %v890, 64
    %v893 = vpop.permute.xlu0 %892
    %v895 = vadd.f32 %v836, %v893
    %v896 = vtanh.pop %v895
    %v897 = vsub.f32 1.0, %v886
    %899 = vrot.lane.b32.xlu0 %v896, 96
    %v900 = vpop.permute.xlu0 %899
    %v902 = vmul.f32 %v897, %v900
    %v903 = vmul.f32 %v886, %v734
    %v904 = vadd.f32 %v902, %v903
    %906 = vrot.lane.b32.xlu0 %v904, 96
    %v907 = vpop.permute.xlu0 %906
    %v908 = vsel %vm55, %v907, 0
    %910 = vmatpush.msra.mxu0 0.0
    %911 = vmatpush.msra.mxu0 0.0
    %912 = vmatpush.msra.mxu0 0.0
    %913 = vmatpush.msra.mxu0 0.0
    %914 = vmatpush.msra.mxu0 0.0
    %915 = vmatpush.msra.mxu0 0.0
    %916 = vmatpush.msra.mxu0 0.0
    %917 = vmatpush.msra.mxu0 0.0
    %918 = vmatpush.msra.mxu0 0.0
    %919 = vmatpush.msra.mxu0 0.0
    %920 = vmatpush.msra.mxu0 0.0
    %921 = vmatpush.msra.mxu0 0.0
    %922 = vmatpush.msra.mxu0 %v97
    %923 = vmatpush.msra.mxu0 %v96
    %924 = vmatpush.msra.mxu0 %v95
    %925 = vmatpush.msra.mxu0 %v94
    %926 = vmatmul.f32.gmra.mxu0 %v908
    %v927 = vpop.f32.mrf.mxu0
    %v928 = vadd.f32 %v223, %v927
    %929 = vdwg.mxu0
    %s930 = scalar_lea.vmem [#allocation6], 8
    %931 = vst.msk [vmem:[%s930] sm:$0x3] %vm250, %v928
    %v932 = vsel %vm250, %v928, -inf
    %933 = vmax.xlane.f32.xlu0 %v932
    %v934 = vpop.xlane.xlu0 %933
    %vm935 = vcmp.eq.f32.partialorder %v928, %v934
    %v936 = vsel %vm935, %v100, 24
    %v937 = vsel %vm250, %v936, 2147483647
    %v938 = vand.u32 %v937, 65535
    %v939 = vshra.s32 %v937, 16
    %v940 = vcvt.s32.f32 %v938
    %v941 = vcvt.s32.f32 %v939
    %942 = vmin.xlane.f32.xlu0 %v941
    %v943 = vpop.xlane.xlu0 %942
    %vm944 = vcmp.eq.f32.partialorder %v941, %v943
    %v945 = vsel %vm944, %v940, inf
    %946 = vmin.xlane.f32.xlu0 %v945
    %v947 = vpop.xlane.xlu0 %946
    %v948 = vcvt.f32.s32 %v947
    %v949 = vcvt.f32.s32 %v943
    %v950 = vshll.u32 %v949, 16
    %v951 = vadd.s32 %v950, %v948
    %vm952 = vcmp.eq.s32.totalorder %v100, 4
    %v953 = vsel %vm952, %v951, %v783
    %vm954 = vcmp.eq.s32.totalorder %v100, %v951
    %v955 = vsel %vm954, 1, 0
    %v956 = vcvt.s32.f32 %v955
    %959 = vrot.lane.b32.xlu0 %v956, 32
    %v960 = vpop.permute.xlu0 %959
    %v962 = vsel %vm55, %v907, %v960
    %v964 = vsel %vm104, %v962, 0
    %966 = vmatpush.msra.mxu0 0.0
    %967 = vmatpush.msra.mxu0 0.0
    %968 = vmatpush.msra.mxu0 0.0
    %969 = vmatpush.msra.mxu0 0.0
    %970 = vmatpush.msra.mxu0 0.0
    %971 = vmatpush.msra.mxu0 0.0
    %972 = vmatpush.msra.mxu0 0.0
    %973 = vmatpush.msra.mxu0 0.0
    %974 = vmatpush.msra.mxu0 0.0
    %975 = vmatpush.msra.mxu0 %v91
    %976 = vmatpush.msra.mxu0 %v89
    %977 = vmatpush.msra.mxu0 %v87
    %978 = vmatpush.msra.mxu0 %v85
    %979 = vmatpush.msra.mxu0 %v83
    %980 = vmatpush.msra.mxu0 %v81
    %981 = vmatpush.msra.mxu0 %v79
    %982 = vmatmul.f32.gmra.mxu0 %v964
    %v983 = vpop.f32.mrf.mxu0
    %v984 = vadd.f32 0.0, %v983
    %985 = vdwg.mxu0
    %986 = vmatpush.msra.mxu0 0.0
    %987 = vmatpush.msra.mxu0 0.0
    %988 = vmatpush.msra.mxu0 0.0
    %989 = vmatpush.msra.mxu0 0.0
    %990 = vmatpush.msra.mxu0 0.0
    %991 = vmatpush.msra.mxu0 0.0
    %992 = vmatpush.msra.mxu0 0.0
    %993 = vmatpush.msra.mxu0 0.0
    %994 = vmatpush.msra.mxu0 0.0
    %995 = vmatpush.msra.mxu0 %v92
    %996 = vmatpush.msra.mxu0 %v90
    %997 = vmatpush.msra.mxu0 %v88
    %998 = vmatpush.msra.mxu0 %v86
    %999 = vmatpush.msra.mxu0 %v84
    %1000 = vmatpush.msra.mxu0 %v82
    %1001 = vmatpush.msra.mxu0 %v80
    %1002 = vmatmul.f32.gmra.mxu0 %v964
    %v1003 = vpop.f32.mrf.mxu0
    %v1004 = vadd.f32 0.0, %v1003
    %1005 = vdwg.mxu0
    %v1006 = vadd.f32 %v984, %v77
    %v1007 = vadd.f32 %v984, %v152
    %v1008 = vadd.f32 %v1004, %v152
    %1010 = vrot.lane.b32.xlu0 %v1007, 32
    %v1011 = vpop.permute.xlu0 %1010
    %v1013 = vadd.f32 %v1006, %v1011
    %v1014 = vxor.u32 %v1013, 2147483648
    %v1015 = vmul.f32 %v1014, 1.442695
    %v1016 = vpow.pop %v1015
    %v1017 = vadd.f32 %v1016, 1.0
    %v1018 = vrcp.pop %v1017
    %v1019 = vmul.f32 %v1017, %v1018
    %v1020 = vsub.f32 1.0, %v1019
    %v1021 = vmul.f32 %v1018, %v1020
    %v1022 = vadd.f32 %v1018, %v1021
    %vm1023 = vweird.f32 %v1017
    %vm1024 = vweird.f32 %v1018
    %vm1025 = vmor %vm1023, %vm1024
    %v1026 = vsel %vm1025, %v1018, %v1022
    %v1027 = vand.u32 2147483647, %v1017
    %vm1028 = vcmp.eq.f32.partialorder %v1027, 8.507059e+37
    %v1029 = vand.u32 %v1017, 2147483648
    %v1030 = vor.u32 1.1754944e-38, %v1029
    %v1031 = vsel %vm1028, %v1030, %v1026
    %v1032 = vmul.f32 1.0, %v1031
    %1034 = vrot.lane.b32.xlu0 %v1008, 32
    %v1035 = vpop.permute.xlu0 %1034
    %v1037 = vadd.f32 %v1006, %v1035
    %v1038 = vxor.u32 %v1037, 2147483648
    %v1039 = vmul.f32 %v1038, 1.442695
    %v1040 = vpow.pop %v1039
    %v1041 = vadd.f32 %v1040, 1.0
    %v1042 = vrcp.pop %v1041
    %v1043 = vmul.f32 %v1041, %v1042
    %v1044 = vsub.f32 1.0, %v1043
    %v1045 = vmul.f32 %v1042, %v1044
    %v1046 = vadd.f32 %v1042, %v1045
    %vm1047 = vweird.f32 %v1041
    %vm1048 = vweird.f32 %v1042
    %vm1049 = vmor %vm1047, %vm1048
    %v1050 = vsel %vm1049, %v1042, %v1046
    %v1051 = vand.u32 2147483647, %v1041
    %vm1052 = vcmp.eq.f32.partialorder %v1051, 8.507059e+37
    %v1053 = vand.u32 %v1041, 2147483648
    %v1054 = vor.u32 1.1754944e-38, %v1053
    %v1055 = vsel %vm1052, %v1054, %v1050
    %v1056 = vmul.f32 1.0, %v1055
    %1057 = vrot.lane.b32.xlu0 %v1008, 96
    %v1058 = vpop.permute.xlu0 %1057
    %v1060 = vmul.f32 %v1032, %v1058
    %1062 = vrot.lane.b32.xlu0 %v1060, 64
    %v1063 = vpop.permute.xlu0 %1062
    %v1065 = vadd.f32 %v1006, %v1063
    %v1066 = vtanh.pop %v1065
    %v1067 = vsub.f32 1.0, %v1056
    %1069 = vrot.lane.b32.xlu0 %v1066, 96
    %v1070 = vpop.permute.xlu0 %1069
    %v1072 = vmul.f32 %v1067, %v1070
    %v1073 = vmul.f32 %v1056, %v904
    %v1074 = vadd.f32 %v1072, %v1073
    %1076 = vrot.lane.b32.xlu0 %v1074, 96
    %v1077 = vpop.permute.xlu0 %1076
    %v1078 = vsel %vm55, %v1077, 0
    %1080 = vmatpush.msra.mxu0 0.0
    %1081 = vmatpush.msra.mxu0 0.0
    %1082 = vmatpush.msra.mxu0 0.0
    %1083 = vmatpush.msra.mxu0 0.0
    %1084 = vmatpush.msra.mxu0 0.0
    %1085 = vmatpush.msra.mxu0 0.0
    %1086 = vmatpush.msra.mxu0 0.0
    %1087 = vmatpush.msra.mxu0 0.0
    %1088 = vmatpush.msra.mxu0 0.0
    %1089 = vmatpush.msra.mxu0 0.0
    %1090 = vmatpush.msra.mxu0 0.0
    %1091 = vmatpush.msra.mxu0 0.0
    %1092 = vmatpush.msra.mxu0 %v97
    %1093 = vmatpush.msra.mxu0 %v96
    %1094 = vmatpush.msra.mxu0 %v95
    %1095 = vmatpush.msra.mxu0 %v94
    %1096 = vmatmul.f32.gmra.mxu0 %v1078
    %v1097 = vpop.f32.mrf.mxu0
    %v1098 = vadd.f32 %v223, %v1097
    %1099 = vdwg.mxu0
    %s1100 = scalar_lea.vmem [#allocation6], 10
    %1101 = vst.msk [vmem:[%s1100] sm:$0x3] %vm250, %v1098
    %v1102 = vsel %vm250, %v1098, -inf
    %1103 = vmax.xlane.f32.xlu0 %v1102
    %v1104 = vpop.xlane.xlu0 %1103
    %vm1105 = vcmp.eq.f32.partialorder %v1098, %v1104
    %v1106 = vsel %vm1105, %v100, 24
    %v1107 = vsel %vm250, %v1106, 2147483647
    %v1108 = vand.u32 %v1107, 65535
    %v1109 = vshra.s32 %v1107, 16
    %v1110 = vcvt.s32.f32 %v1108
    %v1111 = vcvt.s32.f32 %v1109
    %1112 = vmin.xlane.f32.xlu0 %v1111
    %v1113 = vpop.xlane.xlu0 %1112
    %vm1114 = vcmp.eq.f32.partialorder %v1111, %v1113
    %v1115 = vsel %vm1114, %v1110, inf
    %1116 = vmin.xlane.f32.xlu0 %v1115
    %v1117 = vpop.xlane.xlu0 %1116
    %v1118 = vcvt.f32.s32 %v1117
    %v1119 = vcvt.f32.s32 %v1113
    %v1120 = vshll.u32 %v1119, 16
    %v1121 = vadd.s32 %v1120, %v1118
    %vm1122 = vcmp.eq.s32.totalorder %v100, 5
    %v1123 = vsel %vm1122, %v1121, %v953
    %vm1124 = vcmp.eq.s32.totalorder %v100, %v1121
    %v1125 = vsel %vm1124, 1, 0
    %v1126 = vcvt.s32.f32 %v1125
    %1129 = vrot.lane.b32.xlu0 %v1126, 32
    %v1130 = vpop.permute.xlu0 %1129
    %v1132 = vsel %vm55, %v1077, %v1130
    %v1134 = vsel %vm104, %v1132, 0
    %1136 = vmatpush.msra.mxu0 0.0
    %1137 = vmatpush.msra.mxu0 0.0
    %1138 = vmatpush.msra.mxu0 0.0
    %1139 = vmatpush.msra.mxu0 0.0
    %1140 = vmatpush.msra.mxu0 0.0
    %1141 = vmatpush.msra.mxu0 0.0
    %1142 = vmatpush.msra.mxu0 0.0
    %1143 = vmatpush.msra.mxu0 0.0
    %1144 = vmatpush.msra.mxu0 0.0
    %1145 = vmatpush.msra.mxu0 %v91
    %1146 = vmatpush.msra.mxu0 %v89
    %1147 = vmatpush.msra.mxu0 %v87
    %1148 = vmatpush.msra.mxu0 %v85
    %1149 = vmatpush.msra.mxu0 %v83
    %1150 = vmatpush.msra.mxu0 %v81
    %1151 = vmatpush.msra.mxu0 %v79
    %1152 = vmatmul.f32.gmra.mxu0 %v1134
    %v1153 = vpop.f32.mrf.mxu0
    %v1154 = vadd.f32 0.0, %v1153
    %1155 = vdwg.mxu0
    %1156 = vmatpush.msra.mxu0 0.0
    %1157 = vmatpush.msra.mxu0 0.0
    %1158 = vmatpush.msra.mxu0 0.0
    %1159 = vmatpush.msra.mxu0 0.0
    %1160 = vmatpush.msra.mxu0 0.0
    %1161 = vmatpush.msra.mxu0 0.0
    %1162 = vmatpush.msra.mxu0 0.0
    %1163 = vmatpush.msra.mxu0 0.0
    %1164 = vmatpush.msra.mxu0 0.0
    %1165 = vmatpush.msra.mxu0 %v92
    %1166 = vmatpush.msra.mxu0 %v90
    %1167 = vmatpush.msra.mxu0 %v88
    %1168 = vmatpush.msra.mxu0 %v86
    %1169 = vmatpush.msra.mxu0 %v84
    %1170 = vmatpush.msra.mxu0 %v82
    %1171 = vmatpush.msra.mxu0 %v80
    %1172 = vmatmul.f32.gmra.mxu0 %v1134
    %v1173 = vpop.f32.mrf.mxu0
    %v1174 = vadd.f32 0.0, %v1173
    %1175 = vdwg.mxu0
    %v1176 = vadd.f32 %v1154, %v77
    %v1177 = vadd.f32 %v1154, %v152
    %v1178 = vadd.f32 %v1174, %v152
    %1180 = vrot.lane.b32.xlu0 %v1177, 32
    %v1181 = vpop.permute.xlu0 %1180
    %v1183 = vadd.f32 %v1176, %v1181
    %v1184 = vxor.u32 %v1183, 2147483648
    %v1185 = vmul.f32 %v1184, 1.442695
    %v1186 = vpow.pop %v1185
    %v1187 = vadd.f32 %v1186, 1.0
    %v1188 = vrcp.pop %v1187
    %v1189 = vmul.f32 %v1187, %v1188
    %v1190 = vsub.f32 1.0, %v1189
    %v1191 = vmul.f32 %v1188, %v1190
    %v1192 = vadd.f32 %v1188, %v1191
    %vm1193 = vweird.f32 %v1187
    %vm1194 = vweird.f32 %v1188
    %vm1195 = vmor %vm1193, %vm1194
    %v1196 = vsel %vm1195, %v1188, %v1192
    %v1197 = vand.u32 2147483647, %v1187
    %vm1198 = vcmp.eq.f32.partialorder %v1197, 8.507059e+37
    %v1199 = vand.u32 %v1187, 2147483648
    %v1200 = vor.u32 1.1754944e-38, %v1199
    %v1201 = vsel %vm1198, %v1200, %v1196
    %v1202 = vmul.f32 1.0, %v1201
    %1204 = vrot.lane.b32.xlu0 %v1178, 32
    %v1205 = vpop.permute.xlu0 %1204
    %v1207 = vadd.f32 %v1176, %v1205
    %v1208 = vxor.u32 %v1207, 2147483648
    %v1209 = vmul.f32 %v1208, 1.442695
    %v1210 = vpow.pop %v1209
    %v1211 = vadd.f32 %v1210, 1.0
    %v1212 = vrcp.pop %v1211
    %v1213 = vmul.f32 %v1211, %v1212
    %v1214 = vsub.f32 1.0, %v1213
    %v1215 = vmul.f32 %v1212, %v1214
    %v1216 = vadd.f32 %v1212, %v1215
    %vm1217 = vweird.f32 %v1211
    %vm1218 = vweird.f32 %v1212
    %vm1219 = vmor %vm1217, %vm1218
    %v1220 = vsel %vm1219, %v1212, %v1216
    %v1221 = vand.u32 2147483647, %v1211
    %vm1222 = vcmp.eq.f32.partialorder %v1221, 8.507059e+37
    %v1223 = vand.u32 %v1211, 2147483648
    %v1224 = vor.u32 1.1754944e-38, %v1223
    %v1225 = vsel %vm1222, %v1224, %v1220
    %v1226 = vmul.f32 1.0, %v1225
    %1227 = vrot.lane.b32.xlu0 %v1178, 96
    %v1228 = vpop.permute.xlu0 %1227
    %v1230 = vmul.f32 %v1202, %v1228
    %1232 = vrot.lane.b32.xlu0 %v1230, 64
    %v1233 = vpop.permute.xlu0 %1232
    %v1235 = vadd.f32 %v1176, %v1233
    %v1236 = vtanh.pop %v1235
    %v1237 = vsub.f32 1.0, %v1226
    %1239 = vrot.lane.b32.xlu0 %v1236, 96
    %v1240 = vpop.permute.xlu0 %1239
    %v1242 = vmul.f32 %v1237, %v1240
    %v1243 = vmul.f32 %v1226, %v1074
    %v1244 = vadd.f32 %v1242, %v1243
    %1246 = vrot.lane.b32.xlu0 %v1244, 96
    %v1247 = vpop.permute.xlu0 %1246
    %v1248 = vsel %vm55, %v1247, 0
    %1250 = vmatpush.msra.mxu0 0.0
    %1251 = vmatpush.msra.mxu0 0.0
    %1252 = vmatpush.msra.mxu0 0.0
    %1253 = vmatpush.msra.mxu0 0.0
    %1254 = vmatpush.msra.mxu0 0.0
    %1255 = vmatpush.msra.mxu0 0.0
    %1256 = vmatpush.msra.mxu0 0.0
    %1257 = vmatpush.msra.mxu0 0.0
    %1258 = vmatpush.msra.mxu0 0.0
    %1259 = vmatpush.msra.mxu0 0.0
    %1260 = vmatpush.msra.mxu0 0.0
    %1261 = vmatpush.msra.mxu0 0.0
    %1262 = vmatpush.msra.mxu0 %v97
    %1263 = vmatpush.msra.mxu0 %v96
    %1264 = vmatpush.msra.mxu0 %v95
    %1265 = vmatpush.msra.mxu0 %v94
    %1266 = vmatmul.f32.gmra.mxu0 %v1248
    %v1267 = vpop.f32.mrf.mxu0
    %v1268 = vadd.f32 %v223, %v1267
    %1269 = vdwg.mxu0
    %s1270 = scalar_lea.vmem [#allocation6], 12
    %1271 = vst.msk [vmem:[%s1270] sm:$0x3] %vm250, %v1268
    %v1272 = vsel %vm250, %v1268, -inf
    %1273 = vmax.xlane.f32.xlu0 %v1272
    %v1274 = vpop.xlane.xlu0 %1273
    %vm1275 = vcmp.eq.f32.partialorder %v1268, %v1274
    %v1276 = vsel %vm1275, %v100, 24
    %v1277 = vsel %vm250, %v1276, 2147483647
    %v1278 = vand.u32 %v1277, 65535
    %v1279 = vshra.s32 %v1277, 16
    %v1280 = vcvt.s32.f32 %v1278
    %v1281 = vcvt.s32.f32 %v1279
    %1282 = vmin.xlane.f32.xlu0 %v1281
    %v1283 = vpop.xlane.xlu0 %1282
    %vm1284 = vcmp.eq.f32.partialorder %v1281, %v1283
    %v1285 = vsel %vm1284, %v1280, inf
    %1286 = vmin.xlane.f32.xlu0 %v1285
    %v1287 = vpop.xlane.xlu0 %1286
    %v1288 = vcvt.f32.s32 %v1287
    %v1289 = vcvt.f32.s32 %v1283
    %v1290 = vshll.u32 %v1289, 16
    %v1291 = vadd.s32 %v1290, %v1288
    %vm1292 = vcmp.eq.s32.totalorder %v100, 6
    %v1293 = vsel %vm1292, %v1291, %v1123
    %vm1294 = vcmp.eq.s32.totalorder %v100, %v1291
    %v1295 = vsel %vm1294, 1, 0
    %v1296 = vcvt.s32.f32 %v1295
    %1299 = vrot.lane.b32.xlu0 %v1296, 32
    %v1300 = vpop.permute.xlu0 %1299
    %v1302 = vsel %vm55, %v1247, %v1300
    %v1304 = vsel %vm104, %v1302, 0
    %1306 = vmatpush.msra.mxu0 0.0
    %1307 = vmatpush.msra.mxu0 0.0
    %1308 = vmatpush.msra.mxu0 0.0
    %1309 = vmatpush.msra.mxu0 0.0
    %1310 = vmatpush.msra.mxu0 0.0
    %1311 = vmatpush.msra.mxu0 0.0
    %1312 = vmatpush.msra.mxu0 0.0
    %1313 = vmatpush.msra.mxu0 0.0
    %1314 = vmatpush.msra.mxu0 0.0
    %1315 = vmatpush.msra.mxu0 %v91
    %1316 = vmatpush.msra.mxu0 %v89
    %1317 = vmatpush.msra.mxu0 %v87
    %1318 = vmatpush.msra.mxu0 %v85
    %1319 = vmatpush.msra.mxu0 %v83
    %1320 = vmatpush.msra.mxu0 %v81
    %1321 = vmatpush.msra.mxu0 %v79
    %1322 = vmatmul.f32.gmra.mxu0 %v1304
    %v1323 = vpop.f32.mrf.mxu0
    %v1324 = vadd.f32 0.0, %v1323
    %1325 = vdwg.mxu0
    %1326 = vmatpush.msra.mxu0 0.0
    %1327 = vmatpush.msra.mxu0 0.0
    %1328 = vmatpush.msra.mxu0 0.0
    %1329 = vmatpush.msra.mxu0 0.0
    %1330 = vmatpush.msra.mxu0 0.0
    %1331 = vmatpush.msra.mxu0 0.0
    %1332 = vmatpush.msra.mxu0 0.0
    %1333 = vmatpush.msra.mxu0 0.0
    %1334 = vmatpush.msra.mxu0 0.0
    %1335 = vmatpush.msra.mxu0 %v92
    %1336 = vmatpush.msra.mxu0 %v90
    %1337 = vmatpush.msra.mxu0 %v88
    %1338 = vmatpush.msra.mxu0 %v86
    %1339 = vmatpush.msra.mxu0 %v84
    %1340 = vmatpush.msra.mxu0 %v82
    %1341 = vmatpush.msra.mxu0 %v80
    %1342 = vmatmul.f32.gmra.mxu0 %v1304
    %v1343 = vpop.f32.mrf.mxu0
    %v1344 = vadd.f32 0.0, %v1343
    %1345 = vdwg.mxu0
    %v1346 = vadd.f32 %v1324, %v77
    %v1347 = vadd.f32 %v1324, %v152
    %v1348 = vadd.f32 %v1344, %v152
    %1350 = vrot.lane.b32.xlu0 %v1347, 32
    %v1351 = vpop.permute.xlu0 %1350
    %v1353 = vadd.f32 %v1346, %v1351
    %v1354 = vxor.u32 %v1353, 2147483648
    %v1355 = vmul.f32 %v1354, 1.442695
    %v1356 = vpow.pop %v1355
    %v1357 = vadd.f32 %v1356, 1.0
    %v1358 = vrcp.pop %v1357
    %v1359 = vmul.f32 %v1357, %v1358
    %v1360 = vsub.f32 1.0, %v1359
    %v1361 = vmul.f32 %v1358, %v1360
    %v1362 = vadd.f32 %v1358, %v1361
    %vm1363 = vweird.f32 %v1357
    %vm1364 = vweird.f32 %v1358
    %vm1365 = vmor %vm1363, %vm1364
    %v1366 = vsel %vm1365, %v1358, %v1362
    %v1367 = vand.u32 2147483647, %v1357
    %vm1368 = vcmp.eq.f32.partialorder %v1367, 8.507059e+37
    %v1369 = vand.u32 %v1357, 2147483648
    %v1370 = vor.u32 1.1754944e-38, %v1369
    %v1371 = vsel %vm1368, %v1370, %v1366
    %v1372 = vmul.f32 1.0, %v1371
    %1374 = vrot.lane.b32.xlu0 %v1348, 32
    %v1375 = vpop.permute.xlu0 %1374
    %v1377 = vadd.f32 %v1346, %v1375
    %v1378 = vxor.u32 %v1377, 2147483648
    %v1379 = vmul.f32 %v1378, 1.442695
    %v1380 = vpow.pop %v1379
    %v1381 = vadd.f32 %v1380, 1.0
    %v1382 = vrcp.pop %v1381
    %v1383 = vmul.f32 %v1381, %v1382
    %v1384 = vsub.f32 1.0, %v1383
    %v1385 = vmul.f32 %v1382, %v1384
    %v1386 = vadd.f32 %v1382, %v1385
    %vm1387 = vweird.f32 %v1381
    %vm1388 = vweird.f32 %v1382
    %vm1389 = vmor %vm1387, %vm1388
    %v1390 = vsel %vm1389, %v1382, %v1386
    %v1391 = vand.u32 2147483647, %v1381
    %vm1392 = vcmp.eq.f32.partialorder %v1391, 8.507059e+37
    %v1393 = vand.u32 %v1381, 2147483648
    %v1394 = vor.u32 1.1754944e-38, %v1393
    %v1395 = vsel %vm1392, %v1394, %v1390
    %v1396 = vmul.f32 1.0, %v1395
    %1397 = vrot.lane.b32.xlu0 %v1348, 96
    %v1398 = vpop.permute.xlu0 %1397
    %v1400 = vmul.f32 %v1372, %v1398
    %1402 = vrot.lane.b32.xlu0 %v1400, 64
    %v1403 = vpop.permute.xlu0 %1402
    %v1405 = vadd.f32 %v1346, %v1403
    %v1406 = vtanh.pop %v1405
    %v1407 = vsub.f32 1.0, %v1396
    %1409 = vrot.lane.b32.xlu0 %v1406, 96
    %v1410 = vpop.permute.xlu0 %1409
    %v1412 = vmul.f32 %v1407, %v1410
    %v1413 = vmul.f32 %v1396, %v1244
    %v1414 = vadd.f32 %v1412, %v1413
    %1416 = vrot.lane.b32.xlu0 %v1414, 96
    %v1417 = vpop.permute.xlu0 %1416
    %v1418 = vsel %vm55, %v1417, 0
    %1420 = vmatpush.msra.mxu0 0.0
    %1421 = vmatpush.msra.mxu0 0.0
    %1422 = vmatpush.msra.mxu0 0.0
    %1423 = vmatpush.msra.mxu0 0.0
    %1424 = vmatpush.msra.mxu0 0.0
    %1425 = vmatpush.msra.mxu0 0.0
    %1426 = vmatpush.msra.mxu0 0.0
    %1427 = vmatpush.msra.mxu0 0.0
    %1428 = vmatpush.msra.mxu0 0.0
    %1429 = vmatpush.msra.mxu0 0.0
    %1430 = vmatpush.msra.mxu0 0.0
    %1431 = vmatpush.msra.mxu0 0.0
    %1432 = vmatpush.msra.mxu0 %v97
    %1433 = vmatpush.msra.mxu0 %v96
    %1434 = vmatpush.msra.mxu0 %v95
    %1435 = vmatpush.msra.mxu0 %v94
    %1436 = vmatmul.f32.gmra.mxu0 %v1418
    %v1437 = vpop.f32.mrf.mxu0
    %v1438 = vadd.f32 %v223, %v1437
    %1439 = vdwg.mxu0
    %s1440 = scalar_lea.vmem [#allocation6], 14
    %1441 = vst.msk [vmem:[%s1440] sm:$0x3] %vm250, %v1438
    %v1442 = vsel %vm250, %v1438, -inf
    %1443 = vmax.xlane.f32.xlu0 %v1442
    %v1444 = vpop.xlane.xlu0 %1443
    %vm1445 = vcmp.eq.f32.partialorder %v1438, %v1444
    %v1446 = vsel %vm1445, %v100, 24
    %v1447 = vsel %vm250, %v1446, 2147483647
    %v1448 = vand.u32 %v1447, 65535
    %v1449 = vshra.s32 %v1447, 16
    %v1450 = vcvt.s32.f32 %v1448
    %v1451 = vcvt.s32.f32 %v1449
    %1452 = vmin.xlane.f32.xlu0 %v1451
    %v1453 = vpop.xlane.xlu0 %1452
    %vm1454 = vcmp.eq.f32.partialorder %v1451, %v1453
    %v1455 = vsel %vm1454, %v1450, inf
    %1456 = vmin.xlane.f32.xlu0 %v1455
    %v1457 = vpop.xlane.xlu0 %1456
    %v1458 = vcvt.f32.s32 %v1457
    %v1459 = vcvt.f32.s32 %v1453
    %v1460 = vshll.u32 %v1459, 16
    %v1461 = vadd.s32 %v1460, %v1458
    %vm1462 = vcmp.eq.s32.totalorder %v100, 7
    %v1463 = vsel %vm1462, %v1461, %v1293
    %vm1464 = vcmask 58368
    %1465 = vst.msk [vmem:[#allocation5] sm:$0x3] %vm1464, %v1463
    // Predicated region
    $region34: #{tpu_custom_call.1} parent=1 // pred_check
      _
    $region35: #{tpu_custom_call.1} parent=1 // pred_check_branch
      %1467 = sbr.rel (0) target = $region37
    $region36: #{tpu_custom_call.1} parent=1 // pred_region
      %1469 = vsyncadd [#allocation4], 0
      %s1471 = sshll.u32 [#allocation5], 4
      %s1472 = int_to_ptr.vmem [resolvable:$true] %s1471
      %s1473 = sshll.u32 %s7, 4
      %s1474 = int_to_ptr.hbm [resolvable:$true] %s1473
      %1476 = dma.vmem_to_hbm [thread:$0]  %s1472, 32, %s1474, [#allocation4]
    $region37: #{tpu_custom_call.1} parent=1 // pred_fallthru
      _
    // Predicated region
    $region38: #{tpu_custom_call.1} parent=1 // pred_check
      _
    $region39: #{tpu_custom_call.1} parent=1 // pred_check_branch
      %1478 = sbr.rel (0) target = $region41
    $region40: #{tpu_custom_call.1} parent=1 // pred_region
      %1480 = vsyncadd [#allocation7], 0
      %s1481 = sshll.u32 [#allocation6], 4
      %s1482 = int_to_ptr.vmem [resolvable:$true] %s1481
      %s1483 = sshll.u32 %s8, 4
      %s1484 = int_to_ptr.hbm [resolvable:$true] %s1483
      %1489 = dma.vmem_to_hbm [thread:$0]  %s1482, 256, %s1484, [#allocation7], 32, 32, 2
    $region41: #{tpu_custom_call.1} parent=1 // pred_fallthru
      _
    // Predicated region
    $region42: #{tpu_custom_call.1} parent=1 // pred_check
      _
    $region43: #{tpu_custom_call.1} parent=1 // pred_check_branch
      %1491 = sbr.rel (0) target = $region45
    $region44: #{tpu_custom_call.1} parent=1 // pred_region
      %1493 = dma.done [#allocation4], 32
    $region45: #{tpu_custom_call.1} parent=1 // pred_fallthru
      _
    // Predicated region
    $region46: #{tpu_custom_call.1} parent=1 // pred_check
      _
    $region47: #{tpu_custom_call.1} parent=1 // pred_check_branch
      %1495 = sbr.rel (0) target = $region49
    $region48: #{tpu_custom_call.1} parent=1 // pred_region
      %1497 = dma.done [#allocation7], 256
    $region49: #{tpu_custom_call.1} parent=1 // pred_fallthru
      _
    %1498 = vsyncpa [#allocation3], 1
    %1499 = vsyncpa [#allocation4], 1
    %1500 = vsyncpa [#allocation7], 1

</llo_original>
